<compile_context>
chip_gen: v6e
topology: v6e:2x2x1
jax: 0.10.0
libtpu: 0.0.40
codegen_flags: <defaults>
</compile_context>

<pallas_src>
import numpy as np
import jax
import jax.numpy as jnp
from jax import lax
from jax.experimental import pallas as pl
from jax.experimental.pallas import tpu as pltpu


# ----------------------------------------------------------------------------
# helpers
# ----------------------------------------------------------------------------

def _unrolled_or_fori(n, body, unroll_limit=8):
    """Fully unroll short in-kernel loops (LLO scheduler visibility); fori otherwise."""
    if n <= unroll_limit:
        for i in range(n):
            body(i)
    else:
        def _b(i, carry):
            body(i)
            return carry
        lax.fori_loop(0, n, _b, 0)


def _chip_budget():
    """(vmem_limit_bytes, target_output_block_bytes) for this chip generation."""
    try:
        cap = int(pltpu.get_tpu_info().vmem_capacity_bytes)
    except Exception:
        cap = 64 << 20  # conservative default (v7x-class)
    if cap >= (100 << 20):          # v5e / v6e: 128 MiB VMEM per TensorCore
        return 96 << 20, 4 << 20    # big blocks amortize per-step overhead
    # 64 MiB/TC parts (v7x): leave headroom for double-buffering + scratch
    return 44 << 20, (3 << 20) // 2


def _vmem_estimate(th, w, c, itemsize, pad, k):
    """Rough per-step VMEM (lane/sublane padding included): pipeline + scratch."""
    wp = -(-w // 8) * 8
    cp = -(-c // 128) * 128
    in_slab = wp * cp * itemsize
    f32_slab = wp * cp * 4
    bh = th + 2 * pad
    pipe = 2 * (bh * in_slab + th * in_slab)     # (xc + halos) + out, double-buffered
    scratch = k * bh * f32_slab                  # pre-shifted f32 band copies
    return pipe + scratch + (2 << 20)            # misc margin


def _pick_row_tile(h, w, c, itemsize, pad, k, vmem_budget, target_out_bytes,
                   requested=None):
    """Row tile: divides H, multiple of pad, fits the chip VMEM budget."""
    row_bytes = max(1, w * c * itemsize)
    if requested is not None:
        target = int(requested)
    else:
        target = target_out_bytes // row_bytes
    target = min(h, max(pad, target))
    while target > pad and _vmem_estimate(target, w, c, itemsize, pad, k) > vmem_budget:
        target -= 1
    th = max(pad, target)
    while th > pad and (h % th != 0 or th % pad != 0):
        th -= 1
    if h % th != 0 or th % pad != 0:
        th = h
    return th


def _pick_row_band(th):
    for cand in range(min(8, th), 0, -1):
        if th % cand == 0:
            return cand
    return 1


# ----------------------------------------------------------------------------
# k >= 3 kernel: haloed band + pre-shifted W copies + FMA chain
# ----------------------------------------------------------------------------

def _make_cpe_kernel(k, pad, th, rb, w_dim, c_dim):
    """Kernel for one (batch, row-tile) grid step."""
    bh = th + 2 * pad            # haloed band height
    n_bands = th // rb           # inner row-band count
    asm_rows = rb                # assembly chunk (bounds roll/where temporaries)
    n_asm = -(-bh // asm_rows)

    def kernel(xc_ref, xt_ref, xb_ref, w_ref, b_ref, o_ref, sh_ref):
        # xc_ref: (1, th,  W, C)  tile rows
        # xt_ref: (1, pad, W, C)  rows just above the tile (clamped at t==0)
        # xb_ref: (1, pad, W, C)  rows just below the tile (clamped at t==last)
        # w_ref:  (k, k, C)       depthwise taps (residual already folded in)
        # b_ref:  (1, C)          bias
        # o_ref:  (1, th, W, C)
        # sh_ref: (k, bh, W, C)   f32 scratch: pre-shifted, border-masked band copies
        t = pl.program_id(1)
        n_t = pl.num_programs(1)
        f32 = jnp.float32

        # ---- 1) center copy (dx == pad): haloed band, single cast to f32 ----
        sh_ref[pad, pad:pad + th] = xc_ref[0].astype(f32)

        @pl.when(t > 0)
        def _():
            sh_ref[pad, 0:pad] = xt_ref[0].astype(f32)

        @pl.when(t == 0)
        def _():
            sh_ref[pad, 0:pad] = jnp.zeros((pad, w_dim, c_dim), f32)

        @pl.when(t < n_t - 1)
        def _():
            sh_ref[pad, pad + th:bh] = xb_ref[0].astype(f32)

        @pl.when(t == n_t - 1)
        def _():
            sh_ref[pad, pad + th:bh] = jnp.zeros((pad, w_dim, c_dim), f32)

        # ---- hoisted per-step constants ----
        col = lax.broadcasted_iota(jnp.int32, (1, w_dim, 1), 1)
        col_ok = {dx: jnp.logical_and(col + (dx - pad) >= 0,
                                      col + (dx - pad) < w_dim)
                  for dx in range(k) if dx != pad}
        taps = [[w_ref[dy, dx, :].astype(f32)[None, None, :] for dx in range(k)]
                for dy in range(k)]
        bias_band = jnp.broadcast_to(b_ref[0, :].astype(f32)[None, None, :],
                                     (rb, w_dim, c_dim))

        # ---- 2) pre-shifted, border-masked W copies: (k-1) rolls per STEP ----
        def asm_body(i):
            if isinstance(i, (int, np.integer)):
                r0 = min(i * asm_rows, bh - asm_rows)
            else:
                r0 = jnp.minimum(i * asm_rows, bh - asm_rows)
            src = sh_ref[pad, pl.ds(r0, asm_rows)]
            for dx in range(k):
                if dx == pad:
                    continue
                shift = (pad - dx) % w_dim
                v = pltpu.roll(src, shift, axis=1) if shift else src
                sh_ref[dx, pl.ds(r0, asm_rows)] = jnp.where(col_ok[dx], v, 0.0)

        _unrolled_or_fori(n_asm, asm_body)

        # ---- 3) pure FMA chain per row-band; one store per output band ----
        def band_body(bi):
            if isinstance(bi, (int, np.integer)):
                r0 = bi * rb
            else:
                r0 = pl.multiple_of(bi * rb, rb)
            acc = bias_band
            for dy in range(k):
                for dx in range(k):
                    acc = acc + sh_ref[dx, pl.ds(r0 + dy, rb)] * taps[dy][dx]
            o_ref[0, pl.ds(r0, rb)] = acc.astype(o_ref.dtype)

        _unrolled_or_fori(n_bands, band_body)

    return kernel


def _cpe_conv_nhwc(x_nhwc, w_kkc, b_2d, k, pad, th, vmem_limit):
    n, h, w, c = x_nhwc.shape
    rb = _pick_row_band(th)
    n_t = h // th
    th_over_pad = th // pad
    h_over_pad = h // pad

    kernel = _make_cpe_kernel(k, pad, th, rb, w, c)

    return pl.pallas_call(
        kernel,
        out_shape=jax.ShapeDtypeStruct((n, h, w, c), x_nhwc.dtype),
        grid_spec=pltpu.PrefetchScalarGridSpec(
            num_scalar_prefetch=0,
            grid=(n, n_t),
            in_specs=[
                # tile rows
                pl.BlockSpec((1, th, w, c), lambda b, t: (b, t, 0, 0)),
                # pad rows just above the tile (clamped; zeroed in-kernel at t==0)
                pl.BlockSpec((1, pad, w, c),
                             lambda b, t: (b, jnp.maximum(t * th_over_pad - 1, 0), 0, 0)),
                # pad rows just below the tile (clamped; zeroed in-kernel at t==last)
                pl.BlockSpec((1, pad, w, c),
                             lambda b, t: (b, jnp.minimum((t + 1) * th_over_pad,
                                                          h_over_pad - 1), 0, 0)),
                pl.BlockSpec((k, k, c), lambda b, t: (0, 0, 0)),
                pl.BlockSpec((1, c), lambda b, t: (0, 0)),
            ],
            out_specs=pl.BlockSpec((1, th, w, c), lambda b, t: (b, t, 0, 0)),
            scratch_shapes=[pltpu.VMEM((k, th + 2 * pad, w, c), jnp.float32)],
        ),
        compiler_params=pltpu.CompilerParams(
            dimension_semantics=("parallel", "parallel"),
            vmem_limit_bytes=vmem_limit),
    )(x_nhwc, x_nhwc, x_nhwc, w_kkc, b_2d)


# ----------------------------------------------------------------------------
# k == 1 kernel: depthwise 1x1 conv + residual == per-channel scale & bias
# ----------------------------------------------------------------------------

def _k1_kernel(x_ref, w_ref, b_ref, o_ref):
    w = w_ref[0, :].astype(jnp.float32)[None, None, None, :]
    b = b_ref[0, :].astype(jnp.float32)[None, None, None, :]
    o_ref[...] = (x_ref[...].astype(jnp.float32) * w + b).astype(o_ref.dtype)


def _cpe_pointwise_nhwc(x_nhwc, w_1c, b_1c, th, vmem_limit):
    n, h, w, c = x_nhwc.shape
    n_t = h // th
    return pl.pallas_call(
        _k1_kernel,
        out_shape=jax.ShapeDtypeStruct((n, h, w, c), x_nhwc.dtype),
        grid_spec=pltpu.PrefetchScalarGridSpec(
            num_scalar_prefetch=0,
            grid=(n, n_t),
            in_specs=[
                pl.BlockSpec((1, th, w, c), lambda b, t: (b, t, 0, 0)),
                pl.BlockSpec((1, c), lambda b, t: (0, 0)),
                pl.BlockSpec((1, c), lambda b, t: (0, 0)),
            ],
            out_specs=pl.BlockSpec((1, th, w, c), lambda b, t: (b, t, 0, 0)),
        ),
        compiler_params=pltpu.CompilerParams(
            dimension_semantics=("parallel", "parallel"),
            vmem_limit_bytes=vmem_limit),
    )(x_nhwc, w_1c, b_1c)


# ----------------------------------------------------------------------------
# public wrappers
# ----------------------------------------------------------------------------

def conditional_position_encoding_nhwc(x_nhwc, weight, bias, kernel_size, row_tile=None):
    """x_nhwc: (N,H,W,C); weight: (C,1,k,k) PyTorch depthwise layout; bias: (C,)."""
    n, h, w, c = x_nhwc.shape
    k = int(kernel_size)
    if k % 2 == 0:
        raise ValueError("even kernel_size changes the output spatial size in PyTorch "
                         "(padding=k//2); only odd kernel_size is supported")

    itemsize = jnp.dtype(x_nhwc.dtype).itemsize
    vmem_budget, target_out = _chip_budget()

    if k == 1:
        # trivial path: out = x * (w + 1) + b   (residual folded into the scale)
        w_1c = (weight[:, 0, 0, 0].astype(jnp.float32) + 1.0).reshape(1, c)
        b_1c = bias.reshape(1, c).astype(jnp.float32)
        th = _pick_row_tile(h, w, c, itemsize, 1, 1, vmem_budget, target_out, row_tile)
        return _cpe_pointwise_nhwc(x_nhwc, w_1c, b_1c, th, vmem_budget)

    pad = k // 2
    # TODO(synk): support H not divisible by k//2 (e.g. k=5 with odd H) via
    # element-offset halo blocks; Blocked halo indexing needs H % (k//2) == 0.
    if h % pad != 0:
        raise ValueError(f"H={h} must be divisible by pad={pad}")

    # TODO(synk): for C < 128 the lane axis is mostly idle; repack to (N, H, W*C)
    # (dx shifts become lane rolls by C) to get lane-dense stores.

    # (C,1,k,k) -> (k,k,C); taps/bias kept in f32 (tiny; accumulation is f32)
    w_kkc = jnp.transpose(weight[:, 0, :, :], (1, 2, 0)).astype(jnp.float32)
    # fold the residual add into the center tap:  conv(x; w + delta) = conv(x; w) + x
    w_kkc = w_kkc.at[pad, pad, :].add(1.0)
    b_2d = bias.reshape(1, c).astype(jnp.float32)

    th = _pick_row_tile(h, w, c, itemsize, pad, k, vmem_budget, target_out, row_tile)
    return _cpe_conv_nhwc(x_nhwc, w_kkc, b_2d, k, pad, th, vmem_budget)


def conditional_position_encoding(x_nchw, weight, bias, kernel_size, row_tile=None):
    """PyTorch-layout entry: x (N,C,H,W).

    NOTE: the two transposes below are full-tensor HBM round trips around a
    bandwidth-bound op; prefer conditional_position_encoding_nhwc if the caller
    can stay channels-last.
    """
    x_nhwc = jnp.transpose(x_nchw, (0, 2, 3, 1))
    out = conditional_position_encoding_nhwc(x_nhwc, weight, bias, kernel_size, row_tile)
    return jnp.transpose(out, (0, 3, 1, 2))


# ----------------------------------------------------------------------------
# reference + self-test
# ----------------------------------------------------------------------------

def _reference(x_nchw, weight, bias, kernel_size):
    """Pure-JAX reference: depthwise conv (groups=C) + bias + residual, NCHW."""
    c = x_nchw.shape[1]
    pad = kernel_size // 2
    y = lax.conv_general_dilated(
        x_nchw, weight,
        window_strides=(1, 1),
        padding=((pad, pad), (pad, pad)),
        dimension_numbers=("NCHW", "OIHW", "NCHW"),
        feature_group_count=c,
    )
    return y + bias[None, :, None, None] + x_nchw


if __name__ == "__main__":
    N, C, H, W = 2, 4, 16, 16
    key = jax.random.PRNGKey(0)
    kx, kw, kb = jax.random.split(key, 3)
    x = jax.random.normal(kx, (N, C, H, W), dtype=jnp.float32)

    # ---- k = 3: multi-tile (halo top/middle/bottom) and single-tile paths ----
    k3 = 3
    w3 = jax.random.normal(kw, (C, 1, k3, k3), dtype=jnp.float32) * 0.1
    b3 = jax.random.normal(kb, (C,), dtype=jnp.float32) * 0.1
    ref3 = jax.block_until_ready(_reference(x, w3, b3, k3))

    out3m = jax.block_until_ready(
        conditional_position_encoding(x, w3, b3, k3, row_tile=4))
    assert out3m.shape == (N, C, H, W)
    assert np.allclose(np.asarray(out3m), np.asarray(ref3), atol=1e-5, rtol=1e-5), \
        "mismatch vs reference (k=3, multi-tile)"

    out3s = jax.block_until_ready(conditional_position_encoding(x, w3, b3, k3))
    assert np.allclose(np.asarray(out3s), np.asarray(ref3), atol=1e-5, rtol=1e-5), \
        "mismatch vs reference (k=3, single-tile)"

    # ---- k = 5: pad=2 halos, two H-tiles ----
    k5 = 5
    kw5, kb5 = jax.random.split(kw)
    w5 = jax.random.normal(kw5, (C, 1, k5, k5), dtype=jnp.float32) * 0.1
    b5 = jax.random.normal(kb5, (C,), dtype=jnp.float32) * 0.1
    ref5 = jax.block_until_ready(_reference(x, w5, b5, k5))
    out5 = jax.block_until_ready(
        conditional_position_encoding(x, w5, b5, k5, row_tile=8))
    assert np.allclose(np.asarray(out5), np.asarray(ref5), atol=1e-5, rtol=1e-5), \
        "mismatch vs reference (k=5)"

    # ---- k = 1: trivial scale+bias path ----
    k1 = 1
    kw1, kb1 = jax.random.split(kb)
    w1 = jax.random.normal(kw1, (C, 1, 1, 1), dtype=jnp.float32) * 0.1
    b1 = jax.random.normal(kb1, (C,), dtype=jnp.float32) * 0.1
    ref1 = jax.block_until_ready(_reference(x, w1, b1, k1))
    out1 = jax.block_until_ready(conditional_position_encoding(x, w1, b1, k1))
    assert np.allclose(np.asarray(out1), np.asarray(ref1), atol=1e-5, rtol=1e-5), \
        "mismatch vs reference (k=1)"

    print("KERNEL_OK")
</pallas_src>

<mosaic_0001>
module attributes {stable_mosaic.version = 11 : i64} {
  func.func @kernel(%arg0: i32, %arg1: i32, %arg2: memref<1x4x16x4xf32, #tpu.memory_space<vmem>>, %arg3: memref<1x1x16x4xf32, #tpu.memory_space<vmem>>, %arg4: memref<1x1x16x4xf32, #tpu.memory_space<vmem>>, %arg5: memref<3x3x4xf32, #tpu.memory_space<vmem>>, %arg6: memref<1x4xf32, #tpu.memory_space<vmem>>, %arg7: memref<1x4x16x4xf32, #tpu.memory_space<vmem>>, %arg8: memref<3x6x16x4xf32, #tpu.memory_space<vmem>>) attributes {dimension_semantics = [#tpu.dimension_semantics<parallel>, #tpu.dimension_semantics<parallel>], iteration_bounds = array<i64: 2, 4>, scalar_prefetch = 0 : i64, scratch_operands = 1 : i64, tpu.core_type = #tpu.core_type<tc>, window_params = [{transform_indices = @transform_0, window_bounds = array<i64: 1, 4, 16, 4>}, {transform_indices = @transform_1, window_bounds = array<i64: 1, 1, 16, 4>}, {transform_indices = @transform_2, window_bounds = array<i64: 1, 1, 16, 4>}, {pipeline_mode = #tpu.pipeline_mode<synchronous>, transform_indices = @transform_3, window_bounds = array<i64: 3, 3, 4>}, {pipeline_mode = #tpu.pipeline_mode<synchronous>, transform_indices = @transform_4, window_bounds = array<i64: 1, 4>}, {transform_indices = @transform_5, window_bounds = array<i64: 1, 4, 16, 4>}]} {
    %c0 = arith.constant 0 : index
    %c0_0 = arith.constant 0 : index
    %c0_1 = arith.constant 0 : index
    %c0_2 = arith.constant 0 : index
    %0 = vector.load %arg2[%c0, %c0_0, %c0_1, %c0_2] : memref<1x4x16x4xf32, #tpu.memory_space<vmem>>, vector<1x4x16x4xf32>
    %1 = vector.shape_cast %0 : vector<1x4x16x4xf32> to vector<4x16x4xf32>
    %c1 = arith.constant 1 : index
    %c1_3 = arith.constant 1 : index
    %c0_4 = arith.constant 0 : index
    %c0_5 = arith.constant 0 : index
    %2 = vector.load %arg8[%c1, %c1_3, %c0_4, %c0_5] : memref<3x6x16x4xf32, #tpu.memory_space<vmem>>, vector<1x4x16x4xf32>
    %3 = vector.shape_cast %2 : vector<1x4x16x4xf32> to vector<4x16x4xf32>
    %4 = vector.shape_cast %1 : vector<4x16x4xf32> to vector<1x4x16x4xf32>
    tpu.vector_store %arg8[%c1, %c1_3, %c0_4, %c0_5], %4 {strides = array<i32>} : memref<3x6x16x4xf32, #tpu.memory_space<vmem>>, vector<1x4x16x4xf32>,
    %c0_i32 = arith.constant 0 : i32
    %5 = arith.cmpi sgt, %arg1, %c0_i32 : i32
    %6 = arith.extui %5 : i1 to i32
    %c0_i32_6 = arith.constant 0 : i32
    %7 = arith.cmpi ne, %6, %c0_i32_6 : i32
    scf.if %7 {
      %c0_115 = arith.constant 0 : index
      %c0_116 = arith.constant 0 : index
      %c0_117 = arith.constant 0 : index
      %c0_118 = arith.constant 0 : index
      %152 = vector.load %arg3[%c0_115, %c0_116, %c0_117, %c0_118] : memref<1x1x16x4xf32, #tpu.memory_space<vmem>>, vector<1x1x16x4xf32>
      %153 = vector.shape_cast %152 : vector<1x1x16x4xf32> to vector<1x16x4xf32>
      %c1_119 = arith.constant 1 : index
      %c0_120 = arith.constant 0 : index
      %c0_121 = arith.constant 0 : index
      %c0_122 = arith.constant 0 : index
      %154 = vector.load %arg8[%c1_119, %c0_120, %c0_121, %c0_122] : memref<3x6x16x4xf32, #tpu.memory_space<vmem>>, vector<1x1x16x4xf32>
      %155 = vector.shape_cast %154 : vector<1x1x16x4xf32> to vector<1x16x4xf32>
      %156 = vector.shape_cast %153 : vector<1x16x4xf32> to vector<1x1x16x4xf32>
      tpu.vector_store %arg8[%c1_119, %c0_120, %c0_121, %c0_122], %156 {strides = array<i32>} : memref<3x6x16x4xf32, #tpu.memory_space<vmem>>, vector<1x1x16x4xf32>,
    } else {
    }
    %c0_i32_7 = arith.constant 0 : i32
    %8 = arith.cmpi eq, %arg1, %c0_i32_7 : i32
    %9 = arith.extui %8 : i1 to i32
    %c0_i32_8 = arith.constant 0 : i32
    %10 = arith.cmpi ne, %9, %c0_i32_8 : i32
    scf.if %10 {
      %cst_115 = arith.constant 0.000000e+00 : f32
      %152 = vector.broadcast %cst_115 : f32 to vector<1x16x4xf32>
      %c1_116 = arith.constant 1 : index
      %c0_117 = arith.constant 0 : index
      %c0_118 = arith.constant 0 : index
      %c0_119 = arith.constant 0 : index
      %153 = vector.load %arg8[%c1_116, %c0_117, %c0_118, %c0_119] : memref<3x6x16x4xf32, #tpu.memory_space<vmem>>, vector<1x1x16x4xf32>
      %154 = vector.shape_cast %153 : vector<1x1x16x4xf32> to vector<1x16x4xf32>
      %155 = vector.shape_cast %152 : vector<1x16x4xf32> to vector<1x1x16x4xf32>
      tpu.vector_store %arg8[%c1_116, %c0_117, %c0_118, %c0_119], %155 {strides = array<i32>} : memref<3x6x16x4xf32, #tpu.memory_space<vmem>>, vector<1x1x16x4xf32>,
    } else {
    }
    %c3_i32 = arith.constant 3 : i32
    %11 = arith.cmpi slt, %arg1, %c3_i32 : i32
    %12 = arith.extui %11 : i1 to i32
    %c0_i32_9 = arith.constant 0 : i32
    %13 = arith.cmpi ne, %12, %c0_i32_9 : i32
    scf.if %13 {
      %c0_115 = arith.constant 0 : index
      %c0_116 = arith.constant 0 : index
      %c0_117 = arith.constant 0 : index
      %c0_118 = arith.constant 0 : index
      %152 = vector.load %arg4[%c0_115, %c0_116, %c0_117, %c0_118] : memref<1x1x16x4xf32, #tpu.memory_space<vmem>>, vector<1x1x16x4xf32>
      %153 = vector.shape_cast %152 : vector<1x1x16x4xf32> to vector<1x16x4xf32>
      %c1_119 = arith.constant 1 : index
      %c5 = arith.constant 5 : index
      %c0_120 = arith.constant 0 : index
      %c0_121 = arith.constant 0 : index
      %154 = vector.load %arg8[%c1_119, %c5, %c0_120, %c0_121] : memref<3x6x16x4xf32, #tpu.memory_space<vmem>>, vector<1x1x16x4xf32>
      %155 = vector.shape_cast %154 : vector<1x1x16x4xf32> to vector<1x16x4xf32>
      %156 = vector.shape_cast %153 : vector<1x16x4xf32> to vector<1x1x16x4xf32>
      tpu.vector_store %arg8[%c1_119, %c5, %c0_120, %c0_121], %156 {strides = array<i32>} : memref<3x6x16x4xf32, #tpu.memory_space<vmem>>, vector<1x1x16x4xf32>,
    } else {
    }
    %c3_i32_10 = arith.constant 3 : i32
    %14 = arith.cmpi eq, %arg1, %c3_i32_10 : i32
    %15 = arith.extui %14 : i1 to i32
    %c0_i32_11 = arith.constant 0 : i32
    %16 = arith.cmpi ne, %15, %c0_i32_11 : i32
    scf.if %16 {
      %cst_115 = arith.constant 0.000000e+00 : f32
      %152 = vector.broadcast %cst_115 : f32 to vector<1x16x4xf32>
      %c1_116 = arith.constant 1 : index
      %c5 = arith.constant 5 : index
      %c0_117 = arith.constant 0 : index
      %c0_118 = arith.constant 0 : index
      %153 = vector.load %arg8[%c1_116, %c5, %c0_117, %c0_118] : memref<3x6x16x4xf32, #tpu.memory_space<vmem>>, vector<1x1x16x4xf32>
      %154 = vector.shape_cast %153 : vector<1x1x16x4xf32> to vector<1x16x4xf32>
      %155 = vector.shape_cast %152 : vector<1x16x4xf32> to vector<1x1x16x4xf32>
      tpu.vector_store %arg8[%c1_116, %c5, %c0_117, %c0_118], %155 {strides = array<i32>} : memref<3x6x16x4xf32, #tpu.memory_space<vmem>>, vector<1x1x16x4xf32>,
    } else {
    }
    %17 = tpu.iota {dimensions = array<i32: 1>} : vector<1x16x1xi32>
    %c-1_i32 = arith.constant -1 : i32
    %18 = vector.broadcast %c-1_i32 : i32 to vector<1x16x1xi32>
    %19 = arith.addi %17, %18 : vector<1x16x1xi32>
    %c0_i32_12 = arith.constant 0 : i32
    %20 = vector.broadcast %c0_i32_12 : i32 to vector<1x16x1xi32>
    %21 = arith.cmpi sge, %19, %20 : vector<1x16x1xi32>
    %c-1_i32_13 = arith.constant -1 : i32
    %22 = vector.broadcast %c-1_i32_13 : i32 to vector<1x16x1xi32>
    %23 = arith.addi %17, %22 : vector<1x16x1xi32>
    %c16_i32 = arith.constant 16 : i32
    %24 = vector.broadcast %c16_i32 : i32 to vector<1x16x1xi32>
    %25 = arith.cmpi slt, %23, %24 : vector<1x16x1xi32>
    %26 = arith.andi %21, %25 : vector<1x16x1xi1>
    %c1_i32 = arith.constant 1 : i32
    %27 = vector.broadcast %c1_i32 : i32 to vector<1x16x1xi32>
    %28 = arith.addi %17, %27 : vector<1x16x1xi32>
    %c0_i32_14 = arith.constant 0 : i32
    %29 = vector.broadcast %c0_i32_14 : i32 to vector<1x16x1xi32>
    %30 = arith.cmpi sge, %28, %29 : vector<1x16x1xi32>
    %c1_i32_15 = arith.constant 1 : i32
    %31 = vector.broadcast %c1_i32_15 : i32 to vector<1x16x1xi32>
    %32 = arith.addi %17, %31 : vector<1x16x1xi32>
    %c16_i32_16 = arith.constant 16 : i32
    %33 = vector.broadcast %c16_i32_16 : i32 to vector<1x16x1xi32>
    %34 = arith.cmpi slt, %32, %33 : vector<1x16x1xi32>
    %35 = arith.andi %30, %34 : vector<1x16x1xi1>
    %c0_17 = arith.constant 0 : index
    %c0_18 = arith.constant 0 : index
    %c0_19 = arith.constant 0 : index
    %36 = vector.load %arg5[%c0_17, %c0_18, %c0_19] : memref<3x3x4xf32, #tpu.memory_space<vmem>>, vector<1x1x4xf32>
    %37 = vector.shape_cast %36 : vector<1x1x4xf32> to vector<4xf32>
    %38 = vector.shape_cast %37 : vector<4xf32> to vector<1x1x4xf32>
    %c0_20 = arith.constant 0 : index
    %c1_21 = arith.constant 1 : index
    %c0_22 = arith.constant 0 : index
    %39 = vector.load %arg5[%c0_20, %c1_21, %c0_22] : memref<3x3x4xf32, #tpu.memory_space<vmem>>, vector<1x1x4xf32>
    %40 = vector.shape_cast %39 : vector<1x1x4xf32> to vector<4xf32>
    %41 = vector.shape_cast %40 : vector<4xf32> to vector<1x1x4xf32>
    %c0_23 = arith.constant 0 : index
    %c2 = arith.constant 2 : index
    %c0_24 = arith.constant 0 : index
    %42 = vector.load %arg5[%c0_23, %c2, %c0_24] : memref<3x3x4xf32, #tpu.memory_space<vmem>>, vector<1x1x4xf32>
    %43 = vector.shape_cast %42 : vector<1x1x4xf32> to vector<4xf32>
    %44 = vector.shape_cast %43 : vector<4xf32> to vector<1x1x4xf32>
    %c1_25 = arith.constant 1 : index
    %c0_26 = arith.constant 0 : index
    %c0_27 = arith.constant 0 : index
    %45 = vector.load %arg5[%c1_25, %c0_26, %c0_27] : memref<3x3x4xf32, #tpu.memory_space<vmem>>, vector<1x1x4xf32>
    %46 = vector.shape_cast %45 : vector<1x1x4xf32> to vector<4xf32>
    %47 = vector.shape_cast %46 : vector<4xf32> to vector<1x1x4xf32>
    %c1_28 = arith.constant 1 : index
    %c1_29 = arith.constant 1 : index
    %c0_30 = arith.constant 0 : index
    %48 = vector.load %arg5[%c1_28, %c1_29, %c0_30] : memref<3x3x4xf32, #tpu.memory_space<vmem>>, vector<1x1x4xf32>
    %49 = vector.shape_cast %48 : vector<1x1x4xf32> to vector<4xf32>
    %50 = vector.shape_cast %49 : vector<4xf32> to vector<1x1x4xf32>
    %c1_31 = arith.constant 1 : index
    %c2_32 = arith.constant 2 : index
    %c0_33 = arith.constant 0 : index
    %51 = vector.load %arg5[%c1_31, %c2_32, %c0_33] : memref<3x3x4xf32, #tpu.memory_space<vmem>>, vector<1x1x4xf32>
    %52 = vector.shape_cast %51 : vector<1x1x4xf32> to vector<4xf32>
    %53 = vector.shape_cast %52 : vector<4xf32> to vector<1x1x4xf32>
    %c2_34 = arith.constant 2 : index
    %c0_35 = arith.constant 0 : index
    %c0_36 = arith.constant 0 : index
    %54 = vector.load %arg5[%c2_34, %c0_35, %c0_36] : memref<3x3x4xf32, #tpu.memory_space<vmem>>, vector<1x1x4xf32>
    %55 = vector.shape_cast %54 : vector<1x1x4xf32> to vector<4xf32>
    %56 = vector.shape_cast %55 : vector<4xf32> to vector<1x1x4xf32>
    %c2_37 = arith.constant 2 : index
    %c1_38 = arith.constant 1 : index
    %c0_39 = arith.constant 0 : index
    %57 = vector.load %arg5[%c2_37, %c1_38, %c0_39] : memref<3x3x4xf32, #tpu.memory_space<vmem>>, vector<1x1x4xf32>
    %58 = vector.shape_cast %57 : vector<1x1x4xf32> to vector<4xf32>
    %59 = vector.shape_cast %58 : vector<4xf32> to vector<1x1x4xf32>
    %c2_40 = arith.constant 2 : index
    %c2_41 = arith.constant 2 : index
    %c0_42 = arith.constant 0 : index
    %60 = vector.load %arg5[%c2_40, %c2_41, %c0_42] : memref<3x3x4xf32, #tpu.memory_space<vmem>>, vector<1x1x4xf32>
    %61 = vector.shape_cast %60 : vector<1x1x4xf32> to vector<4xf32>
    %62 = vector.shape_cast %61 : vector<4xf32> to vector<1x1x4xf32>
    %c0_43 = arith.constant 0 : index
    %c0_44 = arith.constant 0 : index
    %63 = vector.load %arg6[%c0_43, %c0_44] : memref<1x4xf32, #tpu.memory_space<vmem>>, vector<1x4xf32>
    %64 = vector.shape_cast %63 : vector<1x4xf32> to vector<4xf32>
    %65 = vector.shape_cast %64 : vector<4xf32> to vector<1x1x4xf32>
    %66 = vector.shape_cast %65 : vector<1x1x4xf32> to vector<1x1x4xf32>
    %67 = vector.broadcast %66 : vector<1x1x4xf32> to vector<4x16x4xf32>
    %c1_45 = arith.constant 1 : index
    %c0_46 = arith.constant 0 : index
    %c0_47 = arith.constant 0 : index
    %c0_48 = arith.constant 0 : index
    %68 = vector.load %arg8[%c1_45, %c0_46, %c0_47, %c0_48] : memref<3x6x16x4xf32, #tpu.memory_space<vmem>>, vector<1x4x16x4xf32>
    %69 = vector.shape_cast %68 : vector<1x4x16x4xf32> to vector<4x16x4xf32>
    %c1_i32_49 = arith.constant 1 : i32
    %70 = tpu.dynamic_rotate %69 by %c1_i32_49 dim 1 : vector<4x16x4xf32>, i32 -> vector<4x16x4xf32>
    %cst = arith.constant 0.000000e+00 : f32
    %71 = vector.shape_cast %26 : vector<1x16x1xi1> to vector<1x16x1xi1>
    %72 = vector.broadcast %71 : vector<1x16x1xi1> to vector<4x16x4xi1>
    %73 = vector.broadcast %cst : f32 to vector<4x16x4xf32>
    %74 = arith.select %72, %70, %73 : vector<4x16x4xi1>, vector<4x16x4xf32>
    %c0_50 = arith.constant 0 : index
    %c0_51 = arith.constant 0 : index
    %c0_52 = arith.constant 0 : index
    %c0_53 = arith.constant 0 : index
    %75 = vector.load %arg8[%c0_50, %c0_51, %c0_52, %c0_53] : memref<3x6x16x4xf32, #tpu.memory_space<vmem>>, vector<1x4x16x4xf32>
    %76 = vector.shape_cast %75 : vector<1x4x16x4xf32> to vector<4x16x4xf32>
    %77 = vector.shape_cast %74 : vector<4x16x4xf32> to vector<1x4x16x4xf32>
    tpu.vector_store %arg8[%c0_50, %c0_51, %c0_52, %c0_53], %77 {strides = array<i32>} : memref<3x6x16x4xf32, #tpu.memory_space<vmem>>, vector<1x4x16x4xf32>,
    %c15_i32 = arith.constant 15 : i32
    %78 = tpu.dynamic_rotate %69 by %c15_i32 dim 1 : vector<4x16x4xf32>, i32 -> vector<4x16x4xf32>
    %cst_54 = arith.constant 0.000000e+00 : f32
    %79 = vector.shape_cast %35 : vector<1x16x1xi1> to vector<1x16x1xi1>
    %80 = vector.broadcast %79 : vector<1x16x1xi1> to vector<4x16x4xi1>
    %81 = vector.broadcast %cst_54 : f32 to vector<4x16x4xf32>
    %82 = arith.select %80, %78, %81 : vector<4x16x4xi1>, vector<4x16x4xf32>
    %c2_55 = arith.constant 2 : index
    %c0_56 = arith.constant 0 : index
    %c0_57 = arith.constant 0 : index
    %c0_58 = arith.constant 0 : index
    %83 = vector.load %arg8[%c2_55, %c0_56, %c0_57, %c0_58] : memref<3x6x16x4xf32, #tpu.memory_space<vmem>>, vector<1x4x16x4xf32>
    %84 = vector.shape_cast %83 : vector<1x4x16x4xf32> to vector<4x16x4xf32>
    %85 = vector.shape_cast %82 : vector<4x16x4xf32> to vector<1x4x16x4xf32>
    tpu.vector_store %arg8[%c2_55, %c0_56, %c0_57, %c0_58], %85 {strides = array<i32>} : memref<3x6x16x4xf32, #tpu.memory_space<vmem>>, vector<1x4x16x4xf32>,
    %c1_59 = arith.constant 1 : index
    %c2_60 = arith.constant 2 : index
    %c0_61 = arith.constant 0 : index
    %c0_62 = arith.constant 0 : index
    %86 = vector.load %arg8[%c1_59, %c2_60, %c0_61, %c0_62] : memref<3x6x16x4xf32, #tpu.memory_space<vmem>>, vector<1x4x16x4xf32>
    %87 = vector.shape_cast %86 : vector<1x4x16x4xf32> to vector<4x16x4xf32>
    %c1_i32_63 = arith.constant 1 : i32
    %88 = tpu.dynamic_rotate %87 by %c1_i32_63 dim 1 : vector<4x16x4xf32>, i32 -> vector<4x16x4xf32>
    %cst_64 = arith.constant 0.000000e+00 : f32
    %89 = vector.shape_cast %26 : vector<1x16x1xi1> to vector<1x16x1xi1>
    %90 = vector.broadcast %89 : vector<1x16x1xi1> to vector<4x16x4xi1>
    %91 = vector.broadcast %cst_64 : f32 to vector<4x16x4xf32>
    %92 = arith.select %90, %88, %91 : vector<4x16x4xi1>, vector<4x16x4xf32>
    %c0_65 = arith.constant 0 : index
    %c2_66 = arith.constant 2 : index
    %c0_67 = arith.constant 0 : index
    %c0_68 = arith.constant 0 : index
    %93 = vector.load %arg8[%c0_65, %c2_66, %c0_67, %c0_68] : memref<3x6x16x4xf32, #tpu.memory_space<vmem>>, vector<1x4x16x4xf32>
    %94 = vector.shape_cast %93 : vector<1x4x16x4xf32> to vector<4x16x4xf32>
    %95 = vector.shape_cast %92 : vector<4x16x4xf32> to vector<1x4x16x4xf32>
    tpu.vector_store %arg8[%c0_65, %c2_66, %c0_67, %c0_68], %95 {strides = array<i32>} : memref<3x6x16x4xf32, #tpu.memory_space<vmem>>, vector<1x4x16x4xf32>,
    %c15_i32_69 = arith.constant 15 : i32
    %96 = tpu.dynamic_rotate %87 by %c15_i32_69 dim 1 : vector<4x16x4xf32>, i32 -> vector<4x16x4xf32>
    %cst_70 = arith.constant 0.000000e+00 : f32
    %97 = vector.shape_cast %35 : vector<1x16x1xi1> to vector<1x16x1xi1>
    %98 = vector.broadcast %97 : vector<1x16x1xi1> to vector<4x16x4xi1>
    %99 = vector.broadcast %cst_70 : f32 to vector<4x16x4xf32>
    %100 = arith.select %98, %96, %99 : vector<4x16x4xi1>, vector<4x16x4xf32>
    %c2_71 = arith.constant 2 : index
    %c2_72 = arith.constant 2 : index
    %c0_73 = arith.constant 0 : index
    %c0_74 = arith.constant 0 : index
    %101 = vector.load %arg8[%c2_71, %c2_72, %c0_73, %c0_74] : memref<3x6x16x4xf32, #tpu.memory_space<vmem>>, vector<1x4x16x4xf32>
    %102 = vector.shape_cast %101 : vector<1x4x16x4xf32> to vector<4x16x4xf32>
    %103 = vector.shape_cast %100 : vector<4x16x4xf32> to vector<1x4x16x4xf32>
    tpu.vector_store %arg8[%c2_71, %c2_72, %c0_73, %c0_74], %103 {strides = array<i32>} : memref<3x6x16x4xf32, #tpu.memory_space<vmem>>, vector<1x4x16x4xf32>,
    %c0_75 = arith.constant 0 : index
    %c0_76 = arith.constant 0 : index
    %c0_77 = arith.constant 0 : index
    %c0_78 = arith.constant 0 : index
    %104 = vector.load %arg8[%c0_75, %c0_76, %c0_77, %c0_78] : memref<3x6x16x4xf32, #tpu.memory_space<vmem>>, vector<1x4x16x4xf32>
    %105 = vector.shape_cast %104 : vector<1x4x16x4xf32> to vector<4x16x4xf32>
    %106 = vector.broadcast %38 : vector<1x1x4xf32> to vector<4x16x4xf32>
    %107 = arith.mulf %105, %106 : vector<4x16x4xf32>
    %108 = arith.addf %67, %107 : vector<4x16x4xf32>
    %c1_79 = arith.constant 1 : index
    %c0_80 = arith.constant 0 : index
    %c0_81 = arith.constant 0 : index
    %c0_82 = arith.constant 0 : index
    %109 = vector.load %arg8[%c1_79, %c0_80, %c0_81, %c0_82] : memref<3x6x16x4xf32, #tpu.memory_space<vmem>>, vector<1x4x16x4xf32>
    %110 = vector.shape_cast %109 : vector<1x4x16x4xf32> to vector<4x16x4xf32>
    %111 = vector.broadcast %41 : vector<1x1x4xf32> to vector<4x16x4xf32>
    %112 = arith.mulf %110, %111 : vector<4x16x4xf32>
    %113 = arith.addf %108, %112 : vector<4x16x4xf32>
    %c2_83 = arith.constant 2 : index
    %c0_84 = arith.constant 0 : index
    %c0_85 = arith.constant 0 : index
    %c0_86 = arith.constant 0 : index
    %114 = vector.load %arg8[%c2_83, %c0_84, %c0_85, %c0_86] : memref<3x6x16x4xf32, #tpu.memory_space<vmem>>, vector<1x4x16x4xf32>
    %115 = vector.shape_cast %114 : vector<1x4x16x4xf32> to vector<4x16x4xf32>
    %116 = vector.broadcast %44 : vector<1x1x4xf32> to vector<4x16x4xf32>
    %117 = arith.mulf %115, %116 : vector<4x16x4xf32>
    %118 = arith.addf %113, %117 : vector<4x16x4xf32>
    %c0_87 = arith.constant 0 : index
    %c1_88 = arith.constant 1 : index
    %c0_89 = arith.constant 0 : index
    %c0_90 = arith.constant 0 : index
    %119 = vector.load %arg8[%c0_87, %c1_88, %c0_89, %c0_90] : memref<3x6x16x4xf32, #tpu.memory_space<vmem>>, vector<1x4x16x4xf32>
    %120 = vector.shape_cast %119 : vector<1x4x16x4xf32> to vector<4x16x4xf32>
    %121 = vector.broadcast %47 : vector<1x1x4xf32> to vector<4x16x4xf32>
    %122 = arith.mulf %120, %121 : vector<4x16x4xf32>
    %123 = arith.addf %118, %122 : vector<4x16x4xf32>
    %c1_91 = arith.constant 1 : index
    %c1_92 = arith.constant 1 : index
    %c0_93 = arith.constant 0 : index
    %c0_94 = arith.constant 0 : index
    %124 = vector.load %arg8[%c1_91, %c1_92, %c0_93, %c0_94] : memref<3x6x16x4xf32, #tpu.memory_space<vmem>>, vector<1x4x16x4xf32>
    %125 = vector.shape_cast %124 : vector<1x4x16x4xf32> to vector<4x16x4xf32>
    %126 = vector.broadcast %50 : vector<1x1x4xf32> to vector<4x16x4xf32>
    %127 = arith.mulf %125, %126 : vector<4x16x4xf32>
    %128 = arith.addf %123, %127 : vector<4x16x4xf32>
    %c2_95 = arith.constant 2 : index
    %c1_96 = arith.constant 1 : index
    %c0_97 = arith.constant 0 : index
    %c0_98 = arith.constant 0 : index
    %129 = vector.load %arg8[%c2_95, %c1_96, %c0_97, %c0_98] : memref<3x6x16x4xf32, #tpu.memory_space<vmem>>, vector<1x4x16x4xf32>
    %130 = vector.shape_cast %129 : vector<1x4x16x4xf32> to vector<4x16x4xf32>
    %131 = vector.broadcast %53 : vector<1x1x4xf32> to vector<4x16x4xf32>
    %132 = arith.mulf %130, %131 : vector<4x16x4xf32>
    %133 = arith.addf %128, %132 : vector<4x16x4xf32>
    %c0_99 = arith.constant 0 : index
    %c2_100 = arith.constant 2 : index
    %c0_101 = arith.constant 0 : index
    %c0_102 = arith.constant 0 : index
    %134 = vector.load %arg8[%c0_99, %c2_100, %c0_101, %c0_102] : memref<3x6x16x4xf32, #tpu.memory_space<vmem>>, vector<1x4x16x4xf32>
    %135 = vector.shape_cast %134 : vector<1x4x16x4xf32> to vector<4x16x4xf32>
    %136 = vector.broadcast %56 : vector<1x1x4xf32> to vector<4x16x4xf32>
    %137 = arith.mulf %135, %136 : vector<4x16x4xf32>
    %138 = arith.addf %133, %137 : vector<4x16x4xf32>
    %c1_103 = arith.constant 1 : index
    %c2_104 = arith.constant 2 : index
    %c0_105 = arith.constant 0 : index
    %c0_106 = arith.constant 0 : index
    %139 = vector.load %arg8[%c1_103, %c2_104, %c0_105, %c0_106] : memref<3x6x16x4xf32, #tpu.memory_space<vmem>>, vector<1x4x16x4xf32>
    %140 = vector.shape_cast %139 : vector<1x4x16x4xf32> to vector<4x16x4xf32>
    %141 = vector.broadcast %59 : vector<1x1x4xf32> to vector<4x16x4xf32>
    %142 = arith.mulf %140, %141 : vector<4x16x4xf32>
    %143 = arith.addf %138, %142 : vector<4x16x4xf32>
    %c2_107 = arith.constant 2 : index
    %c2_108 = arith.constant 2 : index
    %c0_109 = arith.constant 0 : index
    %c0_110 = arith.constant 0 : index
    %144 = vector.load %arg8[%c2_107, %c2_108, %c0_109, %c0_110] : memref<3x6x16x4xf32, #tpu.memory_space<vmem>>, vector<1x4x16x4xf32>
    %145 = vector.shape_cast %144 : vector<1x4x16x4xf32> to vector<4x16x4xf32>
    %146 = vector.broadcast %62 : vector<1x1x4xf32> to vector<4x16x4xf32>
    %147 = arith.mulf %145, %146 : vector<4x16x4xf32>
    %148 = arith.addf %143, %147 : vector<4x16x4xf32>
    %c0_111 = arith.constant 0 : index
    %c0_112 = arith.constant 0 : index
    %c0_113 = arith.constant 0 : index
    %c0_114 = arith.constant 0 : index
    %149 = vector.load %arg7[%c0_111, %c0_112, %c0_113, %c0_114] : memref<1x4x16x4xf32, #tpu.memory_space<vmem>>, vector<1x4x16x4xf32>
    %150 = vector.shape_cast %149 : vector<1x4x16x4xf32> to vector<4x16x4xf32>
    %151 = vector.shape_cast %148 : vector<4x16x4xf32> to vector<1x4x16x4xf32>
    tpu.vector_store %arg7[%c0_111, %c0_112, %c0_113, %c0_114], %151 {strides = array<i32>} : memref<1x4x16x4xf32, #tpu.memory_space<vmem>>, vector<1x4x16x4xf32>,
    return
  }
  func.func @transform_0(%arg0: i32, %arg1: i32) -> (i32, i32, i32, i32) {
    %c0_i32 = arith.constant 0 : i32
    %c0_i32_0 = arith.constant 0 : i32
    %c0_i32_1 = arith.constant 0 : i32
    return %arg0, %arg1, %c0_i32, %c0_i32_0 : i32, i32, i32, i32
  }
  func.func @transform_1(%arg0: i32, %arg1: i32) -> (i32, i32, i32, i32) {
    %c4_i32 = arith.constant 4 : i32
    %0 = arith.muli %arg1, %c4_i32 : i32
    %c1_i32 = arith.constant 1 : i32
    %1 = arith.subi %0, %c1_i32 : i32
    %c0_i32 = arith.constant 0 : i32
    %2 = arith.maxsi %1, %c0_i32 : i32
    %c0_i32_0 = arith.constant 0 : i32
    %c0_i32_1 = arith.constant 0 : i32
    %c0_i32_2 = arith.constant 0 : i32
    return %arg0, %2, %c0_i32_0, %c0_i32_1 : i32, i32, i32, i32
  }
  func.func @transform_2(%arg0: i32, %arg1: i32) -> (i32, i32, i32, i32) {
    %c1_i32 = arith.constant 1 : i32
    %0 = arith.addi %arg1, %c1_i32 : i32
    %c4_i32 = arith.constant 4 : i32
    %1 = arith.muli %0, %c4_i32 : i32
    %c15_i32 = arith.constant 15 : i32
    %2 = arith.minsi %1, %c15_i32 : i32
    %c0_i32 = arith.constant 0 : i32
    %c0_i32_0 = arith.constant 0 : i32
    %c0_i32_1 = arith.constant 0 : i32
    return %arg0, %2, %c0_i32, %c0_i32_0 : i32, i32, i32, i32
  }
  func.func @transform_3(%arg0: i32, %arg1: i32) -> (i32, i32, i32) {
    %c0_i32 = arith.constant 0 : i32
    %c0_i32_0 = arith.constant 0 : i32
    %c0_i32_1 = arith.constant 0 : i32
    %c0_i32_2 = arith.constant 0 : i32
    return %c0_i32, %c0_i32_0, %c0_i32_1 : i32, i32, i32
  }
  func.func @transform_4(%arg0: i32, %arg1: i32) -> (i32, i32) {
    %c0_i32 = arith.constant 0 : i32
    %c0_i32_0 = arith.constant 0 : i32
    %c0_i32_1 = arith.constant 0 : i32
    return %c0_i32, %c0_i32_0 : i32, i32
  }
  func.func @transform_5(%arg0: i32, %arg1: i32) -> (i32, i32, i32, i32) {
    %c0_i32 = arith.constant 0 : i32
    %c0_i32_0 = arith.constant 0 : i32
    %c0_i32_1 = arith.constant 0 : i32
    return %arg0, %arg1, %c0_i32, %c0_i32_0 : i32, i32, i32, i32
  }
}

</mosaic_0001>

<llo_original>
// kernel: tpu_custom_call.1
$region0: #{tpu_custom_call.1}
  #allocation0 [shape = 'u32[]', space=smem, size = 0x4, offset = 0x4, fixed_abs, tag = 'smem constant byte address 0x4 - core index']
  #allocation1 [shape = 'u32[144,128]{1,0:T(1,128)}', space=vmem, size = 0x12000, scoped, tag = 'internal scratch']
  #allocation2 [shape = 'f32[3,6,16,4]{3,2,1,0:T(8,128)}', space=vmem, size = 0x24000, scoped, tag = 'scratch operand']
  %s0 = inlined_call_operand.vmem [shape: f32[2,16,16,4], index: 0, kind: input, shape index: {}]
  %s1 = inlined_call_operand.vmem [shape: f32[2,16,16,4], index: 1, kind: input, shape index: {}]
  %s2 = inlined_call_operand.vmem [shape: f32[2,16,16,4], index: 2, kind: input, shape index: {}]
  %s3 = inlined_call_operand.vmem [shape: f32[3,3,4], index: 3, kind: input, shape index: {}]
  %s4 = inlined_call_operand.vmem [shape: f32[1,4], index: 4, kind: input, shape index: {}]
  %s5 = inlined_call_operand.vmem [shape: f32[2,16,16,4], index: 5, kind: output, shape index: {}]
  %s6 = sld [smem:[#allocation0]]
  $region69: #{tpu_custom_call.1} parent=0
    _
  %s8 = ssub.s32 1, %s6
  %s9 = scalar_select 0, %s8, %s6
  loop: start=0, step=1, limit=10
  $region2: #{tpu_custom_call.1} parent=0 // loop_pre_header
    _
  $region3: #{tpu_custom_call.1} parent=0 // loop_header
    %s11 = sphi 0, %s15
    %p12 = scmp.ge.s32.totalorder %s11, 10
    %s18 = sphi 0, %s30
    %s19 = sphi 0, %s26
    %s20 = sphi 0, %s18
    %s21 = sphi 0, %s19
    %s22 = sphi 0, %s20
    %s23 = sphi 0, %s21
    %s35 = sphi 0, %s37
    %s38 = sphi 0, %s35
    %s39 = sphi 0, %s38
    %s55 = sphi 0, %s39
    %s71 = sphi 0, %s73
    %s74 = sphi 0, %s71
    %s75 = sphi 0, %s74
    %s91 = sphi 0, %s75
    %s107 = sphi 0, %s109
    %s110 = sphi 0, %s107
    %s111 = sphi 0, %s110
    %s127 = sphi 0, %s111
    %s131 = sphi 0, %s131
    %s133 = sphi 0, %s131
    %s134 = sphi 0, %s133
    %s148 = sphi 0, %s134
    %s152 = sphi 0, %s152
    %s154 = sphi 0, %s152
    %s155 = sphi 0, %s154
    %s169 = sphi 0, %s155
    %s177 = sphi 0, %s179
    %s180 = sphi 0, %s177
    %s181 = sphi 0, %s180
    %s197 = sphi 0, %s181
  $region4: #{tpu_custom_call.1} parent=0 // loop_header_branch
    %14 = sbr.rel (%p12) target = $region8
  $region5: #{tpu_custom_call.1} parent=0 // loop_body
    %s16 = ssub.s32 %s11, 1
    %s17 = ssub.s32 %s11, 2
    %s24 = sadd.s32 1, %s19
    %p25 = scmp.ge.s32.totalorder %s24, 4
    %s26 = scalar_select %p25, 0, %s24
    %s27 = sadd.s32 1, %s18
    %s28 = scalar_select %p25, %s27, %s18
    %p29 = scmp.ge.s32.totalorder %s28, 2
    %s30 = scalar_select %p29, 0, %s28
    %s31 = ssub.s32 %s18, %s30
    %s32 = ssub.s32 %s19, %s26
    %s33 = sor.u32 %s31, %s32
    %p34 = scmp.eq.s32.totalorder %s33, 0
    %s36 = sadd.s32 %s35, 1
    %s37 = scalar_select %p34, %s35, %s36
    %p40 = pneg %p34
    %p41 = scmp.eq.s32.totalorder %s11, 7
    %p42 = por %p40, %p41
    %p43 = scmp.ne.s32.totalorder %s35, %s38
    %p44 = scmp.eq.s32.totalorder %s11, 0
    %p45 = por %p43, %p44
    %p46 = scmp.ne.s32.totalorder %s35, %s38
    %p47 = scmp.eq.s32.totalorder %s16, 7
    %p48 = por %p46, %p47
    %p49 = scmp.ne.s32.totalorder %s38, %s39
    %p50 = scmp.eq.s32.totalorder %s16, 0
    %p51 = por %p49, %p50
    %p52 = scmp.ne.s32.totalorder %s38, %s39
    %p53 = scmp.eq.s32.totalorder %s17, 7
    %p54 = por %p52, %p53
    %p56 = scmp.ne.s32.totalorder %s39, %s55
    %p57 = scmp.eq.s32.totalorder %s17, 0
    %p58 = por %p56, %p57
    %s59 = smul.u32 %s19, 4
    %s60 = ssub.s32 %s59, 1
    %p61 = scmp.gt.s32.totalorder %s60, 0
    %s62 = scalar_select %p61, %s60, 0
    %s63 = smul.u32 %s26, 4
    %s64 = ssub.s32 %s63, 1
    %p65 = scmp.gt.s32.totalorder %s64, 0
    %s66 = scalar_select %p65, %s64, 0
    %s67 = ssub.s32 %s18, %s30
    %s68 = ssub.s32 %s62, %s66
    %s69 = sor.u32 %s67, %s68
    %p70 = scmp.eq.s32.totalorder %s69, 0
    %s72 = sadd.s32 %s71, 1
    %s73 = scalar_select %p70, %s71, %s72
    %p76 = pneg %p70
    %p77 = scmp.eq.s32.totalorder %s11, 7
    %p78 = por %p76, %p77
    %p79 = scmp.ne.s32.totalorder %s71, %s74
    %p80 = scmp.eq.s32.totalorder %s11, 0
    %p81 = por %p79, %p80
    %p82 = scmp.ne.s32.totalorder %s71, %s74
    %p83 = scmp.eq.s32.totalorder %s16, 7
    %p84 = por %p82, %p83
    %p85 = scmp.ne.s32.totalorder %s74, %s75
    %p86 = scmp.eq.s32.totalorder %s16, 0
    %p87 = por %p85, %p86
    %p88 = scmp.ne.s32.totalorder %s74, %s75
    %p89 = scmp.eq.s32.totalorder %s17, 7
    %p90 = por %p88, %p89
    %p92 = scmp.ne.s32.totalorder %s75, %s91
    %p93 = scmp.eq.s32.totalorder %s17, 0
    %p94 = por %p92, %p93
    %s95 = sadd.s32 %s19, 1
    %s96 = smul.u32 %s95, 4
    %p97 = scmp.lt.s32.totalorder %s96, 15
    %s98 = scalar_select %p97, %s96, 15
    %s99 = sadd.s32 %s26, 1
    %s100 = smul.u32 %s99, 4
    %p101 = scmp.lt.s32.totalorder %s100, 15
    %s102 = scalar_select %p101, %s100, 15
    %s103 = ssub.s32 %s18, %s30
    %s104 = ssub.s32 %s98, %s102
    %s105 = sor.u32 %s103, %s104
    %p106 = scmp.eq.s32.totalorder %s105, 0
    %s108 = sadd.s32 %s107, 1
    %s109 = scalar_select %p106, %s107, %s108
    %p112 = pneg %p106
    %p113 = scmp.eq.s32.totalorder %s11, 7
    %p114 = por %p112, %p113
    %p115 = scmp.ne.s32.totalorder %s107, %s110
    %p116 = scmp.eq.s32.totalorder %s11, 0
    %p117 = por %p115, %p116
    %p118 = scmp.ne.s32.totalorder %s107, %s110
    %p119 = scmp.eq.s32.totalorder %s16, 7
    %p120 = por %p118, %p119
    %p121 = scmp.ne.s32.totalorder %s110, %s111
    %p122 = scmp.eq.s32.totalorder %s16, 0
    %p123 = por %p121, %p122
    %p124 = scmp.ne.s32.totalorder %s110, %s111
    %p125 = scmp.eq.s32.totalorder %s17, 7
    %p126 = por %p124, %p125
    %p128 = scmp.ne.s32.totalorder %s111, %s127
    %p129 = scmp.eq.s32.totalorder %s17, 0
    %p130 = por %p128, %p129
    %s132 = sadd.s32 %s131, 1
    %p135 = scmp.eq.s32.totalorder %s11, 7
    %p136 = scmp.ne.s32.totalorder %s131, %s133
    %p137 = scmp.eq.s32.totalorder %s11, 0
    %p138 = por %p136, %p137
    %p139 = scmp.ne.s32.totalorder %s131, %s133
    %p140 = scmp.eq.s32.totalorder %s16, 7
    %p141 = por %p139, %p140
    %p142 = scmp.ne.s32.totalorder %s133, %s134
    %p143 = scmp.eq.s32.totalorder %s16, 0
    %p144 = por %p142, %p143
    %p145 = scmp.ne.s32.totalorder %s133, %s134
    %p146 = scmp.eq.s32.totalorder %s17, 7
    %p147 = por %p145, %p146
    %p149 = scmp.ne.s32.totalorder %s134, %s148
    %p150 = scmp.eq.s32.totalorder %s17, 0
    %p151 = por %p149, %p150
    %s153 = sadd.s32 %s152, 1
    %p156 = scmp.eq.s32.totalorder %s11, 7
    %p157 = scmp.ne.s32.totalorder %s152, %s154
    %p158 = scmp.eq.s32.totalorder %s11, 0
    %p159 = por %p157, %p158
    %p160 = scmp.ne.s32.totalorder %s152, %s154
    %p161 = scmp.eq.s32.totalorder %s16, 7
    %p162 = por %p160, %p161
    %p163 = scmp.ne.s32.totalorder %s154, %s155
    %p164 = scmp.eq.s32.totalorder %s16, 0
    %p165 = por %p163, %p164
    %p166 = scmp.ne.s32.totalorder %s154, %s155
    %p167 = scmp.eq.s32.totalorder %s17, 7
    %p168 = por %p166, %p167
    %p170 = scmp.ne.s32.totalorder %s155, %s169
    %p171 = scmp.eq.s32.totalorder %s17, 0
    %p172 = por %p170, %p171
    %s173 = ssub.s32 %s18, %s30
    %s174 = ssub.s32 %s19, %s26
    %s175 = sor.u32 %s173, %s174
    %p176 = scmp.eq.s32.totalorder %s175, 0
    %s178 = sadd.s32 %s177, 1
    %s179 = scalar_select %p176, %s177, %s178
    %p182 = pneg %p176
    %p183 = scmp.eq.s32.totalorder %s11, 7
    %p184 = por %p182, %p183
    %p185 = scmp.ne.s32.totalorder %s177, %s180
    %p186 = scmp.eq.s32.totalorder %s11, 0
    %p187 = por %p185, %p186
    %p188 = scmp.ne.s32.totalorder %s177, %s180
    %p189 = scmp.eq.s32.totalorder %s16, 7
    %p190 = por %p188, %p189
    %p191 = scmp.ne.s32.totalorder %s180, %s181
    %p192 = scmp.eq.s32.totalorder %s16, 0
    %p193 = por %p191, %p192
    %p194 = scmp.ne.s32.totalorder %s180, %s181
    %p195 = scmp.eq.s32.totalorder %s17, 7
    %p196 = por %p194, %p195
    %p198 = scmp.ne.s32.totalorder %s181, %s197
    %p199 = scmp.eq.s32.totalorder %s17, 0
    %p200 = por %p198, %p199
    %p201 = scmp.le.s32.totalorder 1, %s11
    %p202 = scmp.lt.s32.totalorder %s11, 9
    %p203 = pnand %p201, %p202
    %p204 = pneg %p203
    // Predicated region
    $region9: #{tpu_custom_call.1} parent=5 // pred_check
      _
    $region10: #{tpu_custom_call.1} parent=5 // pred_check_branch
      %206 = sbr.rel (%p203) target = $region12
    $region11: #{tpu_custom_call.1} parent=5 // pred_region
      %s207 = ssub.s32 %s11, 1
      // Predicated region
      $region13: #{tpu_custom_call.1} parent=11 // pred_check
        %p208 = pneg %p144
      $region14: #{tpu_custom_call.1} parent=11 // pred_check_branch
        %210 = sbr.rel (%p208) target = $region16
      $region15: #{tpu_custom_call.1} parent=11 // pred_region
        _
      $region16: #{tpu_custom_call.1} parent=11 // pred_fallthru
        _
      // Predicated region
      $region17: #{tpu_custom_call.1} parent=11 // pred_check
        %p211 = pneg %p165
      $region18: #{tpu_custom_call.1} parent=11 // pred_check_branch
        %213 = sbr.rel (%p211) target = $region20
      $region19: #{tpu_custom_call.1} parent=11 // pred_region
        _
      $region20: #{tpu_custom_call.1} parent=11 // pred_fallthru
        _
    $region12: #{tpu_custom_call.1} parent=5 // pred_fallthru
      _
    %p214 = scmp.lt.s32.totalorder %s11, 8
    // Predicated region
    $region21: #{tpu_custom_call.1} parent=5 // pred_check
      %p215 = pneg %p214
    $region22: #{tpu_custom_call.1} parent=5 // pred_check_branch
      %217 = sbr.rel (%p215) target = $region24
    $region23: #{tpu_custom_call.1} parent=5 // pred_region
      // Predicated region
      $region25: #{tpu_custom_call.1} parent=23 // pred_check
        %p218 = pneg %p45
      $region26: #{tpu_custom_call.1} parent=23 // pred_check_branch
        %220 = sbr.rel (%p218) target = $region28
      $region27: #{tpu_custom_call.1} parent=23 // pred_region
        %s221 = smul.u32 4, %s19
        %p222 = scmp.lt.s32.totalorder %s18, 1
        %s223 = scalar_select %p222, %s18, 1
        %p224 = scmp.lt.s32.totalorder %s221, 15
        %s225 = scalar_select %p224, %s221, 15
        %s226 = smul.addr %s225, 2
        %s227 = smul.addr %s223, 32
        %s228 = sadd.s32 %s226, %s227
        %s229 = smul.addr %s228, 8
        %s230 = scalar_lea.vmem %s0, %s229
        %s231 = smul.u32 4, %s19
      $region28: #{tpu_custom_call.1} parent=23 // pred_fallthru
        _
      // Predicated region
      $region29: #{tpu_custom_call.1} parent=23 // pred_check
        %p232 = pneg %p81
      $region30: #{tpu_custom_call.1} parent=23 // pred_check_branch
        %234 = sbr.rel (%p232) target = $region32
      $region31: #{tpu_custom_call.1} parent=23 // pred_region
        %s235 = smul.u32 %s19, 4
        %s236 = ssub.s32 %s235, 1
        %p237 = scmp.gt.s32.totalorder %s236, 0
        %s238 = scalar_select %p237, %s236, 0
        %p239 = scmp.lt.s32.totalorder %s18, 1
        %s240 = scalar_select %p239, %s18, 1
        %p241 = scmp.lt.s32.totalorder %s238, 15
        %s242 = scalar_select %p241, %s238, 15
        %s243 = smul.addr %s242, 2
        %s244 = smul.addr %s240, 32
        %s245 = sadd.s32 %s243, %s244
        %s246 = smul.addr %s245, 8
        %s247 = scalar_lea.vmem %s1, %s246
        %s248 = smul.u32 %s19, 4
        %s249 = ssub.s32 %s248, 1
        %p250 = scmp.gt.s32.totalorder %s249, 0
        %s251 = scalar_select %p250, %s249, 0
      $region32: #{tpu_custom_call.1} parent=23 // pred_fallthru
        _
      // Predicated region
      $region33: #{tpu_custom_call.1} parent=23 // pred_check
        %p252 = pneg %p117
      $region34: #{tpu_custom_call.1} parent=23 // pred_check_branch
        %254 = sbr.rel (%p252) target = $region36
      $region35: #{tpu_custom_call.1} parent=23 // pred_region
        %s255 = sadd.s32 %s19, 1
        %s256 = smul.u32 %s255, 4
        %p257 = scmp.lt.s32.totalorder %s256, 15
        %s258 = scalar_select %p257, %s256, 15
        %p259 = scmp.lt.s32.totalorder %s18, 1
        %s260 = scalar_select %p259, %s18, 1
        %p261 = scmp.lt.s32.totalorder %s258, 15
        %s262 = scalar_select %p261, %s258, 15
        %s263 = smul.addr %s262, 2
        %s264 = smul.addr %s260, 32
        %s265 = sadd.s32 %s263, %s264
        %s266 = smul.addr %s265, 8
        %s267 = scalar_lea.vmem %s2, %s266
        %s268 = sadd.s32 %s19, 1
        %s269 = smul.u32 %s268, 4
        %p270 = scmp.lt.s32.totalorder %s269, 15
        %s271 = scalar_select %p270, %s269, 15
      $region36: #{tpu_custom_call.1} parent=23 // pred_fallthru
        _
    $region24: #{tpu_custom_call.1} parent=5 // pred_fallthru
      _
    %p272 = scmp.le.s32.totalorder 1, %s11
    %p273 = scmp.lt.s32.totalorder %s11, 9
    %p274 = pnand %p272, %p273
    %p275 = pneg %p274
    // Predicated region
    $region37: #{tpu_custom_call.1} parent=5 // pred_check
      _
    $region38: #{tpu_custom_call.1} parent=5 // pred_check_branch
      %277 = sbr.rel (%p274) target = $region40
    $region39: #{tpu_custom_call.1} parent=5 // pred_region
      %s278 = ssub.s32 %s11, 1
      %s279 = smul.u32 4, %s21
      %p280 = scmp.lt.s32.totalorder %s20, 1
      %s281 = scalar_select %p280, %s20, 1
      %p282 = scmp.lt.s32.totalorder %s279, 15
      %s283 = scalar_select %p282, %s279, 15
      %s284 = smul.addr %s283, 2
      %s285 = smul.addr %s281, 32
      %s286 = sadd.s32 %s284, %s285
      %s287 = smul.addr %s286, 8
      %s288 = scalar_lea.vmem %s0, %s287
      %p289 = pneg %p51
      %p290 = pneg %p48
      %s291 = smul.u32 %s21, 4
      %s292 = ssub.s32 %s291, 1
      %p293 = scmp.gt.s32.totalorder %s292, 0
      %s294 = scalar_select %p293, %s292, 0
      %p295 = scmp.lt.s32.totalorder %s20, 1
      %s296 = scalar_select %p295, %s20, 1
      %p297 = scmp.lt.s32.totalorder %s294, 15
      %s298 = scalar_select %p297, %s294, 15
      %s299 = smul.addr %s298, 2
      %s300 = smul.addr %s296, 32
      %s301 = sadd.s32 %s299, %s300
      %s302 = smul.addr %s301, 8
      %s303 = scalar_lea.vmem %s1, %s302
      %p304 = pneg %p87
      %p305 = pneg %p84
      %s306 = sadd.s32 %s21, 1
      %s307 = smul.u32 %s306, 4
      %p308 = scmp.lt.s32.totalorder %s307, 15
      %s309 = scalar_select %p308, %s307, 15
      %p310 = scmp.lt.s32.totalorder %s20, 1
      %s311 = scalar_select %p310, %s20, 1
      %p312 = scmp.lt.s32.totalorder %s309, 15
      %s313 = scalar_select %p312, %s309, 15
      %s314 = smul.addr %s313, 2
      %s315 = smul.addr %s311, 32
      %s316 = sadd.s32 %s314, %s315
      %s317 = smul.addr %s316, 8
      %s318 = scalar_lea.vmem %s2, %s317
      %p319 = pneg %p123
      %p320 = pneg %p120
      %p321 = pneg %p144
      %p322 = pneg %p141
      %p323 = pneg %p165
      %p324 = pneg %p162
      %p325 = pneg %p193
      %p326 = pneg %p190
      %s327 = smul.u32 4, %s21
      %p328 = scmp.lt.s32.totalorder %s20, 1
      %s329 = scalar_select %p328, %s20, 1
      %p330 = scmp.lt.s32.totalorder %s327, 15
      %s331 = scalar_select %p330, %s327, 15
      %s332 = smul.addr %s331, 2
      %s333 = smul.addr %s329, 32
      %s334 = sadd.s32 %s332, %s333
      %s335 = smul.addr %s334, 8
      %s336 = scalar_lea.vmem %s5, %s335
      %s337 = smul.u32 4, %s21
      %p338 = scmp.lt.s32.totalorder %s20, 1
      %s339 = scalar_select %p338, %s20, 1
      %p340 = scmp.lt.s32.totalorder %s337, 15
      %s341 = scalar_select %p340, %s337, 15
      %s342 = smul.addr %s341, 2
      %s343 = smul.addr %s339, 32
      %s344 = sadd.s32 %s342, %s343
      %s345 = smul.addr %s344, 8
      %s346 = scalar_lea.vmem %s0, %s345
      %s347 = smul.u32 4, %s21
      %s348 = smul.u32 %s21, 4
      %s349 = ssub.s32 %s348, 1
      %p350 = scmp.gt.s32.totalorder %s349, 0
      %s351 = scalar_select %p350, %s349, 0
      %p352 = scmp.lt.s32.totalorder %s20, 1
      %s353 = scalar_select %p352, %s20, 1
      %p354 = scmp.lt.s32.totalorder %s351, 15
      %s355 = scalar_select %p354, %s351, 15
      %s356 = smul.addr %s355, 2
      %s357 = smul.addr %s353, 32
      %s358 = sadd.s32 %s356, %s357
      %s359 = smul.addr %s358, 8
      %s360 = scalar_lea.vmem %s1, %s359
      %s361 = smul.u32 %s21, 4
      %s362 = ssub.s32 %s361, 1
      %p363 = scmp.gt.s32.totalorder %s362, 0
      %s364 = scalar_select %p363, %s362, 0
      %s365 = sadd.s32 %s21, 1
      %s366 = smul.u32 %s365, 4
      %p367 = scmp.lt.s32.totalorder %s366, 15
      %s368 = scalar_select %p367, %s366, 15
      %p369 = scmp.lt.s32.totalorder %s20, 1
      %s370 = scalar_select %p369, %s20, 1
      %p371 = scmp.lt.s32.totalorder %s368, 15
      %s372 = scalar_select %p371, %s368, 15
      %s373 = smul.addr %s372, 2
      %s374 = smul.addr %s370, 32
      %s375 = sadd.s32 %s373, %s374
      %s376 = smul.addr %s375, 8
      %s377 = scalar_lea.vmem %s2, %s376
      %s378 = sadd.s32 %s21, 1
      %s379 = smul.u32 %s378, 4
      %p380 = scmp.lt.s32.totalorder %s379, 15
      %s381 = scalar_select %p380, %s379, 15
      %s382 = smul.u32 4, %s21
      %p383 = scmp.lt.s32.totalorder %s20, 1
      %s384 = scalar_select %p383, %s20, 1
      %p385 = scmp.lt.s32.totalorder %s382, 15
      %s386 = scalar_select %p385, %s382, 15
      %s387 = smul.addr %s386, 2
      %s388 = smul.addr %s384, 32
      %s389 = sadd.s32 %s387, %s388
      %s390 = smul.addr %s389, 8
      %s391 = scalar_lea.vmem %s5, %s390
      %s392 = smul.u32 4, %s21
      %v393 = vld [vmem:[%s346] sm:$0xff]
      %v394 = vld [vmem:[%s346 + $0x8] sm:$0xff]
      %v395 = vld [vmem:[%s346 + $0x10] sm:$0xff]
      %v396 = vld [vmem:[%s346 + $0x18] sm:$0xff]
      %v397 = vld [vmem:[%s346 + $0x20] sm:$0xff]
      %v398 = vld [vmem:[%s346 + $0x28] sm:$0xff]
      %v399 = vld [vmem:[%s346 + $0x30] sm:$0xff]
      %v400 = vld [vmem:[%s346 + $0x38] sm:$0xff]
      %s401 = scalar_lea.vmem [#allocation2], 112
      %vm402 = vcmask 31744
      %403 = vst.msk [vmem:[%s401] sm:$0xff] %vm402, %v393
      %404 = vst.msk [vmem:[%s401 + $0x8] sm:$0xff] %vm402, %v394
      %405 = vst.msk [vmem:[%s401 + $0x10] sm:$0xff] %vm402, %v395
      %406 = vst.msk [vmem:[%s401 + $0x18] sm:$0xff] %vm402, %v396
      %407 = vst.msk [vmem:[%s401 + $0x20] sm:$0xff] %vm402, %v397
      %408 = vst.msk [vmem:[%s401 + $0x28] sm:$0xff] %vm402, %v398
      %409 = vst.msk [vmem:[%s401 + $0x30] sm:$0xff] %vm402, %v399
      %410 = vst.msk [vmem:[%s401 + $0x38] sm:$0xff] %vm402, %v400
      %p411 = scmp.gt.s32.totalorder %s21, 0
      // Predicated region
      $region41: #{tpu_custom_call.1} parent=39 // pred_check
        %p412 = pneg %p411
      $region42: #{tpu_custom_call.1} parent=39 // pred_check_branch
        %414 = sbr.rel (%p412) target = $region44
      $region43: #{tpu_custom_call.1} parent=39 // pred_region
        %v415 = vld [vmem:[%s360] sm:$0xff]
        %v416 = vld [vmem:[%s360 + $0x8] sm:$0xff]
        %s417 = scalar_lea.vmem [#allocation2], 96
        %418 = vst.msk [vmem:[%s417] sm:$0xff] %vm402, %v415
        %419 = vst.msk [vmem:[%s417 + $0x8] sm:$0xff] %vm402, %v416
      $region44: #{tpu_custom_call.1} parent=39 // pred_fallthru
        _
      %p420 = scmp.eq.s32.totalorder %s21, 0
      // Predicated region
      $region45: #{tpu_custom_call.1} parent=39 // pred_check
        %p421 = pneg %p420
      $region46: #{tpu_custom_call.1} parent=39 // pred_check_branch
        %423 = sbr.rel (%p421) target = $region48
      $region47: #{tpu_custom_call.1} parent=39 // pred_region
        %s424 = scalar_lea.vmem [#allocation2], 96
        %425 = vst.msk [vmem:[%s424] sm:$0xff] %vm402, 0.0
        %426 = vst.msk [vmem:[%s424 + $0x8] sm:$0xff] %vm402, 0.0
      $region48: #{tpu_custom_call.1} parent=39 // pred_fallthru
        _
      %p427 = scmp.lt.s32.totalorder %s21, 3
      // Predicated region
      $region49: #{tpu_custom_call.1} parent=39 // pred_check
        %p428 = pneg %p427
      $region50: #{tpu_custom_call.1} parent=39 // pred_check_branch
        %430 = sbr.rel (%p428) target = $region52
      $region51: #{tpu_custom_call.1} parent=39 // pred_region
        %v431 = vld [vmem:[%s377] sm:$0xff]
        %v432 = vld [vmem:[%s377 + $0x8] sm:$0xff]
        %s433 = scalar_lea.vmem [#allocation2], 176
        %434 = vst.msk [vmem:[%s433] sm:$0xff] %vm402, %v431
        %435 = vst.msk [vmem:[%s433 + $0x8] sm:$0xff] %vm402, %v432
      $region52: #{tpu_custom_call.1} parent=39 // pred_fallthru
        _
      %p436 = scmp.eq.s32.totalorder %s21, 3
      // Predicated region
      $region53: #{tpu_custom_call.1} parent=39 // pred_check
        %p437 = pneg %p436
      $region54: #{tpu_custom_call.1} parent=39 // pred_check_branch
        %439 = sbr.rel (%p437) target = $region56
      $region55: #{tpu_custom_call.1} parent=39 // pred_region
        %s440 = scalar_lea.vmem [#allocation2], 176
        %441 = vst.msk [vmem:[%s440] sm:$0xff] %vm402, 0.0
        %442 = vst.msk [vmem:[%s440 + $0x8] sm:$0xff] %vm402, 0.0
      $region56: #{tpu_custom_call.1} parent=39 // pred_fallthru
        _
      %v443 = vlaneseq
      %v444 = vshrl.u32 %v443, 7
      %v445 = vadd.s32 %v444, 8
      %v446 = vadd.s32 %v444, 4294967295
      %v447 = vadd.s32 %v445, 4294967295
      %vm448 = vcmp.ge.s32.totalorder %v446, 0
      %vm449 = vcmp.ge.s32.totalorder %v447, 0
      %vm450 = vcmp.lt.s32.totalorder %v446, 16
      %vm451 = vcmp.lt.s32.totalorder %v447, 16
      %vm452 = vmand %vm448, %vm450
      %vm453 = vmand %vm449, %vm451
      %v454 = vadd.s32 %v444, 1
      %v455 = vadd.s32 %v445, 1
      %vm456 = vcmp.ge.s32.totalorder %v454, 0
      %vm457 = vcmp.ge.s32.totalorder %v455, 0
      %vm458 = vcmp.lt.s32.totalorder %v454, 16
      %vm459 = vcmp.lt.s32.totalorder %v455, 16
      %vm460 = vmand %vm456, %vm458
      %vm461 = vmand %vm457, %vm459
      %v462 = vld [vmem:[%s3] sm:$0x1]
      %v463 = vld [vmem:[%s3 + $0x1] sm:$0x1]
      %v464 = vld [vmem:[%s3 + $0x2] sm:$0x1]
      %s465 = scalar_lea.vmem %s3, 4
      %v466 = vld [vmem:[%s465] sm:$0x1]
      %v467 = vld [vmem:[%s465 + $0x1] sm:$0x1]
      %v468 = vld [vmem:[%s465 + $0x2] sm:$0x1]
      %s469 = scalar_lea.vmem %s3, 8
      %v470 = vld [vmem:[%s469] sm:$0x1]
      %v471 = vld [vmem:[%s469 + $0x1] sm:$0x1]
      %v472 = vld [vmem:[%s469 + $0x2] sm:$0x1]
      %v473 = vld [vmem:[%s4] sm:$0x1]
      %v475 = vlaneseq
      %v476 = vshrl.u32 %v475, 7
      %v477 = vsub.s32 0, %v476
      %v478 = vrot.slane %v473, %v477
      %s480 = scalar_lea.vmem [#allocation2], 96
      %v481 = vld [vmem:[%s480] sm:$0xff]
      %v482 = vld [vmem:[%s480 + $0x8] sm:$0xff]
      %v483 = vld [vmem:[%s480 + $0x10] sm:$0xff]
      %v484 = vld [vmem:[%s480 + $0x18] sm:$0xff]
      %v485 = vld [vmem:[%s480 + $0x20] sm:$0xff]
      %v486 = vld [vmem:[%s480 + $0x28] sm:$0xff]
      %v487 = vld [vmem:[%s480 + $0x30] sm:$0xff]
      %v488 = vld [vmem:[%s480 + $0x38] sm:$0xff]
      %v489 = vrot.slane %v481, 7
      %v490 = vrot.slane %v483, 7
      %v491 = vrot.slane %v485, 7
      %v492 = vrot.slane %v487, 7
      %v493 = vrot.slane %v482, 7
      %v494 = vrot.slane %v484, 7
      %v495 = vrot.slane %v486, 7
      %v496 = vrot.slane %v488, 7
      %vm497 = vcmp.lt.s32.totalorder %v444, 1
      %v498 = vsel %vm497, %v489, %v493
      %v499 = vsel %vm497, %v490, %v494
      %v500 = vsel %vm497, %v491, %v495
      %v501 = vsel %vm497, %v492, %v496
      %v502 = vsel %vm497, %v493, %v489
      %v503 = vsel %vm497, %v494, %v490
      %v504 = vsel %vm497, %v495, %v491
      %v505 = vsel %vm497, %v496, %v492
      %v506 = vsel %vm452, 1, 0
      %v507 = vsel %vm453, 1, 0
      %vm508 = vcmp.eq.s32.totalorder %v506, 1
      %vm509 = vcmp.eq.s32.totalorder %v507, 1
      %v510 = vsel %vm508, %v502, 0.0
      %v511 = vsel %vm509, %v498, 0.0
      %v512 = vsel %vm508, %v503, 0.0
      %v513 = vsel %vm509, %v499, 0.0
      %v514 = vsel %vm508, %v504, 0.0
      %v515 = vsel %vm509, %v500, 0.0
      %v516 = vsel %vm508, %v505, 0.0
      %v517 = vsel %vm509, %v501, 0.0
      %518 = vst.msk [vmem:[#allocation2] sm:$0xff] %vm402, %v510
      %519 = vst.msk [vmem:[#allocation2 + $0x8] sm:$0xff] %vm402, %v511
      %520 = vst.msk [vmem:[#allocation2 + $0x10] sm:$0xff] %vm402, %v512
      %521 = vst.msk [vmem:[#allocation2 + $0x18] sm:$0xff] %vm402, %v513
      %522 = vst.msk [vmem:[#allocation2 + $0x20] sm:$0xff] %vm402, %v514
      %523 = vst.msk [vmem:[#allocation2 + $0x28] sm:$0xff] %vm402, %v515
      %524 = vst.msk [vmem:[#allocation2 + $0x30] sm:$0xff] %vm402, %v516
      %525 = vst.msk [vmem:[#allocation2 + $0x38] sm:$0xff] %vm402, %v517
      %v526 = vrot.slane %v481, 1
      %v527 = vrot.slane %v483, 1
      %v528 = vrot.slane %v485, 1
      %v529 = vrot.slane %v487, 1
      %v530 = vrot.slane %v482, 1
      %v531 = vrot.slane %v484, 1
      %v532 = vrot.slane %v486, 1
      %v533 = vrot.slane %v488, 1
      %vm534 = vcmp.lt.s32.totalorder %v444, 7
      %v535 = vsel %vm534, %v526, %v530
      %v536 = vsel %vm534, %v527, %v531
      %v537 = vsel %vm534, %v528, %v532
      %v538 = vsel %vm534, %v529, %v533
      %v539 = vsel %vm534, %v530, %v526
      %v540 = vsel %vm534, %v531, %v527
      %v541 = vsel %vm534, %v532, %v528
      %v542 = vsel %vm534, %v533, %v529
      %v543 = vsel %vm460, 1, 0
      %v544 = vsel %vm461, 1, 0
      %vm545 = vcmp.eq.s32.totalorder %v543, 1
      %vm546 = vcmp.eq.s32.totalorder %v544, 1
      %v547 = vsel %vm545, %v535, 0.0
      %v548 = vsel %vm546, %v539, 0.0
      %v549 = vsel %vm545, %v536, 0.0
      %v550 = vsel %vm546, %v540, 0.0
      %v551 = vsel %vm545, %v537, 0.0
      %v552 = vsel %vm546, %v541, 0.0
      %v553 = vsel %vm545, %v538, 0.0
      %v554 = vsel %vm546, %v542, 0.0
      %s555 = scalar_lea.vmem [#allocation2], 192
      %556 = vst.msk [vmem:[%s555] sm:$0xff] %vm402, %v547
      %557 = vst.msk [vmem:[%s555 + $0x8] sm:$0xff] %vm402, %v548
      %558 = vst.msk [vmem:[%s555 + $0x10] sm:$0xff] %vm402, %v549
      %559 = vst.msk [vmem:[%s555 + $0x18] sm:$0xff] %vm402, %v550
      %560 = vst.msk [vmem:[%s555 + $0x20] sm:$0xff] %vm402, %v551
      %561 = vst.msk [vmem:[%s555 + $0x28] sm:$0xff] %vm402, %v552
      %562 = vst.msk [vmem:[%s555 + $0x30] sm:$0xff] %vm402, %v553
      %563 = vst.msk [vmem:[%s555 + $0x38] sm:$0xff] %vm402, %v554
      %s564 = scalar_lea.vmem [#allocation2], 128
      %v565 = vld [vmem:[%s564] sm:$0xff]
      %v566 = vld [vmem:[%s564 + $0x8] sm:$0xff]
      %v567 = vld [vmem:[%s564 + $0x10] sm:$0xff]
      %v568 = vld [vmem:[%s564 + $0x18] sm:$0xff]
      %v569 = vld [vmem:[%s564 + $0x20] sm:$0xff]
      %v570 = vld [vmem:[%s564 + $0x28] sm:$0xff]
      %v571 = vld [vmem:[%s564 + $0x30] sm:$0xff]
      %v572 = vld [vmem:[%s564 + $0x38] sm:$0xff]
      %v573 = vrot.slane %v565, 7
      %v574 = vrot.slane %v567, 7
      %v575 = vrot.slane %v569, 7
      %v576 = vrot.slane %v571, 7
      %v577 = vrot.slane %v566, 7
      %v578 = vrot.slane %v568, 7
      %v579 = vrot.slane %v570, 7
      %v580 = vrot.slane %v572, 7
      %v581 = vsel %vm497, %v573, %v577
      %v582 = vsel %vm497, %v574, %v578
      %v583 = vsel %vm497, %v575, %v579
      %v584 = vsel %vm497, %v576, %v580
      %v585 = vsel %vm497, %v577, %v573
      %v586 = vsel %vm497, %v578, %v574
      %v587 = vsel %vm497, %v579, %v575
      %v588 = vsel %vm497, %v580, %v576
      %v589 = vsel %vm508, %v585, 0.0
      %v590 = vsel %vm509, %v581, 0.0
      %v591 = vsel %vm508, %v586, 0.0
      %v592 = vsel %vm509, %v582, 0.0
      %v593 = vsel %vm508, %v587, 0.0
      %v594 = vsel %vm509, %v583, 0.0
      %v595 = vsel %vm508, %v588, 0.0
      %v596 = vsel %vm509, %v584, 0.0
      %s597 = scalar_lea.vmem [#allocation2], 32
      %598 = vst.msk [vmem:[%s597] sm:$0xff] %vm402, %v589
      %599 = vst.msk [vmem:[%s597 + $0x8] sm:$0xff] %vm402, %v590
      %600 = vst.msk [vmem:[%s597 + $0x10] sm:$0xff] %vm402, %v591
      %601 = vst.msk [vmem:[%s597 + $0x18] sm:$0xff] %vm402, %v592
      %602 = vst.msk [vmem:[%s597 + $0x20] sm:$0xff] %vm402, %v593
      %603 = vst.msk [vmem:[%s597 + $0x28] sm:$0xff] %vm402, %v594
      %604 = vst.msk [vmem:[%s597 + $0x30] sm:$0xff] %vm402, %v595
      %605 = vst.msk [vmem:[%s597 + $0x38] sm:$0xff] %vm402, %v596
      %v606 = vrot.slane %v565, 1
      %v607 = vrot.slane %v567, 1
      %v608 = vrot.slane %v569, 1
      %v609 = vrot.slane %v571, 1
      %v610 = vrot.slane %v566, 1
      %v611 = vrot.slane %v568, 1
      %v612 = vrot.slane %v570, 1
      %v613 = vrot.slane %v572, 1
      %v614 = vsel %vm534, %v606, %v610
      %v615 = vsel %vm534, %v607, %v611
      %v616 = vsel %vm534, %v608, %v612
      %v617 = vsel %vm534, %v609, %v613
      %v618 = vsel %vm534, %v610, %v606
      %v619 = vsel %vm534, %v611, %v607
      %v620 = vsel %vm534, %v612, %v608
      %v621 = vsel %vm534, %v613, %v609
      %v622 = vsel %vm545, %v614, 0.0
      %v623 = vsel %vm546, %v618, 0.0
      %v624 = vsel %vm545, %v615, 0.0
      %v625 = vsel %vm546, %v619, 0.0
      %v626 = vsel %vm545, %v616, 0.0
      %v627 = vsel %vm546, %v620, 0.0
      %v628 = vsel %vm545, %v617, 0.0
      %v629 = vsel %vm546, %v621, 0.0
      %s630 = scalar_lea.vmem [#allocation2], 224
      %631 = vst.msk [vmem:[%s630] sm:$0xff] %vm402, %v622
      %632 = vst.msk [vmem:[%s630 + $0x8] sm:$0xff] %vm402, %v623
      %633 = vst.msk [vmem:[%s630 + $0x10] sm:$0xff] %vm402, %v624
      %634 = vst.msk [vmem:[%s630 + $0x18] sm:$0xff] %vm402, %v625
      %635 = vst.msk [vmem:[%s630 + $0x20] sm:$0xff] %vm402, %v626
      %636 = vst.msk [vmem:[%s630 + $0x28] sm:$0xff] %vm402, %v627
      %637 = vst.msk [vmem:[%s630 + $0x30] sm:$0xff] %vm402, %v628
      %638 = vst.msk [vmem:[%s630 + $0x38] sm:$0xff] %vm402, %v629
      %v639 = vld [vmem:[#allocation2] sm:$0xff]
      %v640 = vld [vmem:[#allocation2 + $0x8] sm:$0xff]
      %v641 = vld [vmem:[#allocation2 + $0x10] sm:$0xff]
      %v642 = vld [vmem:[#allocation2 + $0x18] sm:$0xff]
      %v643 = vld [vmem:[#allocation2 + $0x20] sm:$0xff]
      %v644 = vld [vmem:[#allocation2 + $0x28] sm:$0xff]
      %v645 = vld [vmem:[#allocation2 + $0x30] sm:$0xff]
      %v646 = vld [vmem:[#allocation2 + $0x38] sm:$0xff]
      %v647 = vlaneseq
      %v648 = vshrl.u32 %v647, 7
      %v649 = vsub.s32 0, %v648
      %v650 = vrot.slane %v462, %v649
      %v651 = vmul.f32 %v639, %v650
      %v652 = vmul.f32 %v640, %v650
      %v653 = vmul.f32 %v641, %v650
      %v654 = vmul.f32 %v642, %v650
      %v655 = vmul.f32 %v643, %v650
      %v656 = vmul.f32 %v644, %v650
      %v657 = vmul.f32 %v645, %v650
      %v658 = vmul.f32 %v646, %v650
      %v659 = vadd.f32 %v478, %v651
      %v660 = vadd.f32 %v478, %v652
      %v661 = vadd.f32 %v478, %v653
      %v662 = vadd.f32 %v478, %v654
      %v663 = vadd.f32 %v478, %v655
      %v664 = vadd.f32 %v478, %v656
      %v665 = vadd.f32 %v478, %v657
      %v666 = vadd.f32 %v478, %v658
      %v667 = vld [vmem:[%s480] sm:$0xff]
      %v668 = vld [vmem:[%s480 + $0x8] sm:$0xff]
      %v669 = vld [vmem:[%s480 + $0x10] sm:$0xff]
      %v670 = vld [vmem:[%s480 + $0x18] sm:$0xff]
      %v671 = vld [vmem:[%s480 + $0x20] sm:$0xff]
      %v672 = vld [vmem:[%s480 + $0x28] sm:$0xff]
      %v673 = vld [vmem:[%s480 + $0x30] sm:$0xff]
      %v674 = vld [vmem:[%s480 + $0x38] sm:$0xff]
      %v675 = vlaneseq
      %v676 = vshrl.u32 %v675, 7
      %v677 = vsub.s32 0, %v676
      %v678 = vrot.slane %v463, %v677
      %v679 = vmul.f32 %v667, %v678
      %v680 = vmul.f32 %v668, %v678
      %v681 = vmul.f32 %v669, %v678
      %v682 = vmul.f32 %v670, %v678
      %v683 = vmul.f32 %v671, %v678
      %v684 = vmul.f32 %v672, %v678
      %v685 = vmul.f32 %v673, %v678
      %v686 = vmul.f32 %v674, %v678
      %v687 = vadd.f32 %v659, %v679
      %v688 = vadd.f32 %v660, %v680
      %v689 = vadd.f32 %v661, %v681
      %v690 = vadd.f32 %v662, %v682
      %v691 = vadd.f32 %v663, %v683
      %v692 = vadd.f32 %v664, %v684
      %v693 = vadd.f32 %v665, %v685
      %v694 = vadd.f32 %v666, %v686
      %v695 = vld [vmem:[%s555] sm:$0xff]
      %v696 = vld [vmem:[%s555 + $0x8] sm:$0xff]
      %v697 = vld [vmem:[%s555 + $0x10] sm:$0xff]
      %v698 = vld [vmem:[%s555 + $0x18] sm:$0xff]
      %v699 = vld [vmem:[%s555 + $0x20] sm:$0xff]
      %v700 = vld [vmem:[%s555 + $0x28] sm:$0xff]
      %v701 = vld [vmem:[%s555 + $0x30] sm:$0xff]
      %v702 = vld [vmem:[%s555 + $0x38] sm:$0xff]
      %v703 = vlaneseq
      %v704 = vshrl.u32 %v703, 7
      %v705 = vsub.s32 0, %v704
      %v706 = vrot.slane %v464, %v705
      %v707 = vmul.f32 %v695, %v706
      %v708 = vmul.f32 %v696, %v706
      %v709 = vmul.f32 %v697, %v706
      %v710 = vmul.f32 %v698, %v706
      %v711 = vmul.f32 %v699, %v706
      %v712 = vmul.f32 %v700, %v706
      %v713 = vmul.f32 %v701, %v706
      %v714 = vmul.f32 %v702, %v706
      %v715 = vadd.f32 %v687, %v707
      %v716 = vadd.f32 %v688, %v708
      %v717 = vadd.f32 %v689, %v709
      %v718 = vadd.f32 %v690, %v710
      %v719 = vadd.f32 %v691, %v711
      %v720 = vadd.f32 %v692, %v712
      %v721 = vadd.f32 %v693, %v713
      %v722 = vadd.f32 %v694, %v714
      %s723 = scalar_lea.vmem [#allocation2], 16
      %v724 = vld [vmem:[%s723] sm:$0xff]
      %v725 = vld [vmem:[%s723 + $0x8] sm:$0xff]
      %v726 = vld [vmem:[%s723 + $0x10] sm:$0xff]
      %v727 = vld [vmem:[%s723 + $0x18] sm:$0xff]
      %v728 = vld [vmem:[%s723 + $0x20] sm:$0xff]
      %v729 = vld [vmem:[%s723 + $0x28] sm:$0xff]
      %v730 = vld [vmem:[%s723 + $0x30] sm:$0xff]
      %v731 = vld [vmem:[%s723 + $0x38] sm:$0xff]
      %v732 = vlaneseq
      %v733 = vshrl.u32 %v732, 7
      %v734 = vsub.s32 0, %v733
      %v735 = vrot.slane %v466, %v734
      %v736 = vmul.f32 %v724, %v735
      %v737 = vmul.f32 %v725, %v735
      %v738 = vmul.f32 %v726, %v735
      %v739 = vmul.f32 %v727, %v735
      %v740 = vmul.f32 %v728, %v735
      %v741 = vmul.f32 %v729, %v735
      %v742 = vmul.f32 %v730, %v735
      %v743 = vmul.f32 %v731, %v735
      %v744 = vadd.f32 %v715, %v736
      %v745 = vadd.f32 %v716, %v737
      %v746 = vadd.f32 %v717, %v738
      %v747 = vadd.f32 %v718, %v739
      %v748 = vadd.f32 %v719, %v740
      %v749 = vadd.f32 %v720, %v741
      %v750 = vadd.f32 %v721, %v742
      %v751 = vadd.f32 %v722, %v743
      %v752 = vld [vmem:[%s401] sm:$0xff]
      %v753 = vld [vmem:[%s401 + $0x8] sm:$0xff]
      %v754 = vld [vmem:[%s401 + $0x10] sm:$0xff]
      %v755 = vld [vmem:[%s401 + $0x18] sm:$0xff]
      %v756 = vld [vmem:[%s401 + $0x20] sm:$0xff]
      %v757 = vld [vmem:[%s401 + $0x28] sm:$0xff]
      %v758 = vld [vmem:[%s401 + $0x30] sm:$0xff]
      %v759 = vld [vmem:[%s401 + $0x38] sm:$0xff]
      %v760 = vlaneseq
      %v761 = vshrl.u32 %v760, 7
      %v762 = vsub.s32 0, %v761
      %v763 = vrot.slane %v467, %v762
      %v764 = vmul.f32 %v752, %v763
      %v765 = vmul.f32 %v753, %v763
      %v766 = vmul.f32 %v754, %v763
      %v767 = vmul.f32 %v755, %v763
      %v768 = vmul.f32 %v756, %v763
      %v769 = vmul.f32 %v757, %v763
      %v770 = vmul.f32 %v758, %v763
      %v771 = vmul.f32 %v759, %v763
      %v772 = vadd.f32 %v744, %v764
      %v773 = vadd.f32 %v745, %v765
      %v774 = vadd.f32 %v746, %v766
      %v775 = vadd.f32 %v747, %v767
      %v776 = vadd.f32 %v748, %v768
      %v777 = vadd.f32 %v749, %v769
      %v778 = vadd.f32 %v750, %v770
      %v779 = vadd.f32 %v751, %v771
      %s780 = scalar_lea.vmem [#allocation2], 208
      %v781 = vld [vmem:[%s780] sm:$0xff]
      %v782 = vld [vmem:[%s780 + $0x8] sm:$0xff]
      %v783 = vld [vmem:[%s780 + $0x10] sm:$0xff]
      %v784 = vld [vmem:[%s780 + $0x18] sm:$0xff]
      %v785 = vld [vmem:[%s780 + $0x20] sm:$0xff]
      %v786 = vld [vmem:[%s780 + $0x28] sm:$0xff]
      %v787 = vld [vmem:[%s780 + $0x30] sm:$0xff]
      %v788 = vld [vmem:[%s780 + $0x38] sm:$0xff]
      %v789 = vlaneseq
      %v790 = vshrl.u32 %v789, 7
      %v791 = vsub.s32 0, %v790
      %v792 = vrot.slane %v468, %v791
      %v793 = vmul.f32 %v781, %v792
      %v794 = vmul.f32 %v782, %v792
      %v795 = vmul.f32 %v783, %v792
      %v796 = vmul.f32 %v784, %v792
      %v797 = vmul.f32 %v785, %v792
      %v798 = vmul.f32 %v786, %v792
      %v799 = vmul.f32 %v787, %v792
      %v800 = vmul.f32 %v788, %v792
      %v801 = vadd.f32 %v772, %v793
      %v802 = vadd.f32 %v773, %v794
      %v803 = vadd.f32 %v774, %v795
      %v804 = vadd.f32 %v775, %v796
      %v805 = vadd.f32 %v776, %v797
      %v806 = vadd.f32 %v777, %v798
      %v807 = vadd.f32 %v778, %v799
      %v808 = vadd.f32 %v779, %v800
      %v809 = vld [vmem:[%s597] sm:$0xff]
      %v810 = vld [vmem:[%s597 + $0x8] sm:$0xff]
      %v811 = vld [vmem:[%s597 + $0x10] sm:$0xff]
      %v812 = vld [vmem:[%s597 + $0x18] sm:$0xff]
      %v813 = vld [vmem:[%s597 + $0x20] sm:$0xff]
      %v814 = vld [vmem:[%s597 + $0x28] sm:$0xff]
      %v815 = vld [vmem:[%s597 + $0x30] sm:$0xff]
      %v816 = vld [vmem:[%s597 + $0x38] sm:$0xff]
      %v817 = vlaneseq
      %v818 = vshrl.u32 %v817, 7
      %v819 = vsub.s32 0, %v818
      %v820 = vrot.slane %v470, %v819
      %v821 = vmul.f32 %v809, %v820
      %v822 = vmul.f32 %v810, %v820
      %v823 = vmul.f32 %v811, %v820
      %v824 = vmul.f32 %v812, %v820
      %v825 = vmul.f32 %v813, %v820
      %v826 = vmul.f32 %v814, %v820
      %v827 = vmul.f32 %v815, %v820
      %v828 = vmul.f32 %v816, %v820
      %v829 = vadd.f32 %v801, %v821
      %v830 = vadd.f32 %v802, %v822
      %v831 = vadd.f32 %v803, %v823
      %v832 = vadd.f32 %v804, %v824
      %v833 = vadd.f32 %v805, %v825
      %v834 = vadd.f32 %v806, %v826
      %v835 = vadd.f32 %v807, %v827
      %v836 = vadd.f32 %v808, %v828
      %v837 = vld [vmem:[%s564] sm:$0xff]
      %v838 = vld [vmem:[%s564 + $0x8] sm:$0xff]
      %v839 = vld [vmem:[%s564 + $0x10] sm:$0xff]
      %v840 = vld [vmem:[%s564 + $0x18] sm:$0xff]
      %v841 = vld [vmem:[%s564 + $0x20] sm:$0xff]
      %v842 = vld [vmem:[%s564 + $0x28] sm:$0xff]
      %v843 = vld [vmem:[%s564 + $0x30] sm:$0xff]
      %v844 = vld [vmem:[%s564 + $0x38] sm:$0xff]
      %v845 = vlaneseq
      %v846 = vshrl.u32 %v845, 7
      %v847 = vsub.s32 0, %v846
      %v848 = vrot.slane %v471, %v847
      %v849 = vmul.f32 %v837, %v848
      %v850 = vmul.f32 %v838, %v848
      %v851 = vmul.f32 %v839, %v848
      %v852 = vmul.f32 %v840, %v848
      %v853 = vmul.f32 %v841, %v848
      %v854 = vmul.f32 %v842, %v848
      %v855 = vmul.f32 %v843, %v848
      %v856 = vmul.f32 %v844, %v848
      %v857 = vadd.f32 %v829, %v849
      %v858 = vadd.f32 %v830, %v850
      %v859 = vadd.f32 %v831, %v851
      %v860 = vadd.f32 %v832, %v852
      %v861 = vadd.f32 %v833, %v853
      %v862 = vadd.f32 %v834, %v854
      %v863 = vadd.f32 %v835, %v855
      %v864 = vadd.f32 %v836, %v856
      %v865 = vld [vmem:[%s630] sm:$0xff]
      %v866 = vld [vmem:[%s630 + $0x8] sm:$0xff]
      %v867 = vld [vmem:[%s630 + $0x10] sm:$0xff]
      %v868 = vld [vmem:[%s630 + $0x18] sm:$0xff]
      %v869 = vld [vmem:[%s630 + $0x20] sm:$0xff]
      %v870 = vld [vmem:[%s630 + $0x28] sm:$0xff]
      %v871 = vld [vmem:[%s630 + $0x30] sm:$0xff]
      %v872 = vld [vmem:[%s630 + $0x38] sm:$0xff]
      %v873 = vlaneseq
      %v874 = vshrl.u32 %v873, 7
      %v875 = vsub.s32 0, %v874
      %v876 = vrot.slane %v472, %v875
      %v877 = vmul.f32 %v865, %v876
      %v878 = vmul.f32 %v866, %v876
      %v879 = vmul.f32 %v867, %v876
      %v880 = vmul.f32 %v868, %v876
      %v881 = vmul.f32 %v869, %v876
      %v882 = vmul.f32 %v870, %v876
      %v883 = vmul.f32 %v871, %v876
      %v884 = vmul.f32 %v872, %v876
      %v885 = vadd.f32 %v857, %v877
      %v886 = vadd.f32 %v858, %v878
      %v887 = vadd.f32 %v859, %v879
      %v888 = vadd.f32 %v860, %v880
      %v889 = vadd.f32 %v861, %v881
      %v890 = vadd.f32 %v862, %v882
      %v891 = vadd.f32 %v863, %v883
      %v892 = vadd.f32 %v864, %v884
      %893 = vst.msk [vmem:[%s391] sm:$0xff] %vm402, %v885
      %894 = vst.msk [vmem:[%s391 + $0x8] sm:$0xff] %vm402, %v886
      %895 = vst.msk [vmem:[%s391 + $0x10] sm:$0xff] %vm402, %v887
      %896 = vst.msk [vmem:[%s391 + $0x18] sm:$0xff] %vm402, %v888
      %897 = vst.msk [vmem:[%s391 + $0x20] sm:$0xff] %vm402, %v889
      %898 = vst.msk [vmem:[%s391 + $0x28] sm:$0xff] %vm402, %v890
      %899 = vst.msk [vmem:[%s391 + $0x30] sm:$0xff] %vm402, %v891
      %900 = vst.msk [vmem:[%s391 + $0x38] sm:$0xff] %vm402, %v892
      %s901 = smul.u32 4, %s21
      %p902 = scmp.lt.s32.totalorder %s20, 1
      %s903 = scalar_select %p902, %s20, 1
      %p904 = scmp.lt.s32.totalorder %s901, 15
      %s905 = scalar_select %p904, %s901, 15
      %s906 = smul.addr %s905, 2
      %s907 = smul.addr %s903, 32
      %s908 = sadd.s32 %s906, %s907
      %s909 = smul.addr %s908, 8
      %s910 = scalar_lea.vmem %s5, %s909
      // Predicated region
      $region57: #{tpu_custom_call.1} parent=39 // pred_check
        %p911 = pneg %p190
      $region58: #{tpu_custom_call.1} parent=39 // pred_check_branch
        %913 = sbr.rel (%p911) target = $region60
      $region59: #{tpu_custom_call.1} parent=39 // pred_region
        %s914 = smul.u32 4, %s21
      $region60: #{tpu_custom_call.1} parent=39 // pred_fallthru
        _
    $region40: #{tpu_custom_call.1} parent=5 // pred_fallthru
      _
    %p915 = scmp.le.s32.totalorder 2, %s11
    // Predicated region
    $region61: #{tpu_custom_call.1} parent=5 // pred_check
      %p916 = pneg %p915
    $region62: #{tpu_custom_call.1} parent=5 // pred_check_branch
      %918 = sbr.rel (%p916) target = $region64
    $region63: #{tpu_custom_call.1} parent=5 // pred_region
      %s919 = ssub.s32 %s11, 2
      // Predicated region
      $region65: #{tpu_custom_call.1} parent=63 // pred_check
        %p920 = pneg %p196
      $region66: #{tpu_custom_call.1} parent=63 // pred_check_branch
        %922 = sbr.rel (%p920) target = $region68
      $region67: #{tpu_custom_call.1} parent=63 // pred_region
        %s923 = smul.u32 4, %s23
        %p924 = scmp.lt.s32.totalorder %s22, 1
        %s925 = scalar_select %p924, %s22, 1
        %p926 = scmp.lt.s32.totalorder %s923, 15
        %s927 = scalar_select %p926, %s923, 15
        %s928 = smul.addr %s927, 2
        %s929 = smul.addr %s925, 32
        %s930 = sadd.s32 %s928, %s929
        %s931 = smul.addr %s930, 8
        %s932 = scalar_lea.vmem %s5, %s931
      $region68: #{tpu_custom_call.1} parent=63 // pred_fallthru
        _
    $region64: #{tpu_custom_call.1} parent=5 // pred_fallthru
      _
  $region6: #{tpu_custom_call.1} parent=0 // loop_footer
    %s15 = sadd.s32 1, %s11
  $region7: #{tpu_custom_call.1} parent=0 // loop_footer_branch
    %10 = sbr.rel target = $region3
  $region8: #{tpu_custom_call.1} parent=0 // loop_exit
    _

</llo_original>
